<compile_context>
chip_gen: v6e
topology: v6e:2x2x1
jax: 0.10.0
libtpu: 0.0.40
codegen_flags: <defaults>
</compile_context>

<pallas_src>
from functools import partial

import jax
import jax.numpy as jnp
from jax import lax
from jax.experimental import pallas as pl
from jax.experimental.pallas import tpu as pltpu


def _vmem_limit_bytes(default=48 * 1024 * 1024):
    """Per-generation scoped-VMEM limit: ~3/4 of physical, capped at 96 MB.

    v7x (64 MiB physical)  -> 48 MB;  v5e/v6e (128 MiB) -> 96 MB.
    Falls back to 48 MB if the query is unavailable.
    """
    try:
        cap = int(pltpu.get_tpu_info().vmem_capacity_bytes)
    except Exception:
        return default
    return min(cap * 3 // 4, 96 * 1024 * 1024)


# ----------------------------- Pallas kernel --------------------------------

def _fused_attn_kernel(x_ref, wqkv_ref, bqkv_ref, wproj_ref, bproj_ref,
                       o_ref, qkv_scr, heads_scr, *, num_heads, head_dim):
    """One batch element per grid step: qkv proj -> attention -> out proj.

    x_ref:     (1, N, C)   input slab for this batch element.
    wqkv_ref:  (C, 3C)     VMEM-resident (softmax scale pre-folded into the
                           first C columns by the wrapper).
    bqkv_ref:  (1, 3C)     qkv bias (zeros when qkv_bias=False), scale-folded.
    wproj_ref: (C, C)      VMEM-resident output-projection weight.
    bproj_ref: (1, C)      output-projection bias.
    o_ref:     (1, N, C)   lane-dense output slab.
    qkv_scr:   (N, 3C)     VMEM scratch holding qkv; per-head q/k/v are
                           zero-cost static ref slices of it.
    heads_scr: (N, C)      VMEM scratch collecting per-head outputs before the
                           single full-K projection matmul.
    """
    C = num_heads * head_dim
    x = x_ref[0]                                               # (N, C)

    # qkv projection (full K and full 3C width -> best MXU utilization).
    qkv = jnp.dot(x, wqkv_ref[...], preferred_element_type=jnp.float32)
    qkv = qkv + bqkv_ref[...].astype(jnp.float32)              # (N, 3C) f32
    qkv_scr[...] = qkv.astype(qkv_scr.dtype)

    # Static head loop with static ref slices: each iteration's live set is
    # just one head's (N, hd) operands + its (N, N) scores; results land
    # straight in the VMEM scratch.  (A fori_loop would make the lane offset
    # dynamic and force rotations for head_dim not a multiple of 128.)
    # TODO(synk): process heads in lane-aligned pairs (hd=64) to halve
    # misaligned lane accesses -- secondary to the structural fusion.
    for h in range(num_heads):
        lo = h * head_dim
        q = qkv_scr[:, lo:lo + head_dim]                       # scale folded
        k = qkv_scr[:, C + lo:C + lo + head_dim]
        v = qkv_scr[:, 2 * C + lo:2 * C + lo + head_dim]

        # q @ k^T without an explicit transpose: contract the last dims.
        s = lax.dot_general(q, k, (((1,), (1,)), ((), ())),
                            preferred_element_type=jnp.float32)  # (N, N) f32

        # Numerically-stable softmax in f32; denominator via EUP reciprocal.
        s = s - jnp.max(s, axis=-1, keepdims=True)
        p = jnp.exp(s)
        p = p * pl.reciprocal(jnp.sum(p, axis=-1, keepdims=True), approx=True)

        o = jnp.dot(p.astype(v.dtype), v,
                    preferred_element_type=jnp.float32)          # (N, hd)
        heads_scr[:, lo:lo + head_dim] = o.astype(heads_scr.dtype)

    # Output projection fused in: one full-K matmul, lane-dense (N, C) store.
    out = jnp.dot(heads_scr[...], wproj_ref[...],
                  preferred_element_type=jnp.float32)
    out = out + bproj_ref[...].astype(jnp.float32)
    o_ref[0] = out.astype(o_ref.dtype)


# ------------------------------ JAX wrapper ----------------------------------

def _pallas_fused_attention(x, w_qkv_t, b_qkv, w_proj_t, b_proj,
                            num_heads, head_dim):
    """x: (B, N, C) -> (B, N, C); one batch element (all heads) per step."""
    B, N, C = x.shape
    dtype = x.dtype
    kernel = partial(_fused_attn_kernel, num_heads=num_heads,
                     head_dim=head_dim)

    return pl.pallas_call(
        kernel,
        out_shape=jax.ShapeDtypeStruct((B, N, C), dtype),
        grid=(B,),
        in_specs=[
            pl.BlockSpec((1, N, C), lambda b: (b, 0, 0)),     # x (per batch)
            pl.BlockSpec((C, 3 * C), lambda b: (0, 0)),       # W_qkv resident
            pl.BlockSpec((1, 3 * C), lambda b: (0, 0)),       # b_qkv resident
            pl.BlockSpec((C, C), lambda b: (0, 0)),           # W_proj resident
            pl.BlockSpec((1, C), lambda b: (0, 0)),           # b_proj resident
        ],
        out_specs=pl.BlockSpec((1, N, C), lambda b: (b, 0, 0)),
        scratch_shapes=[
            pltpu.VMEM((N, 3 * C), dtype),                    # qkv scratch
            pltpu.VMEM((N, C), dtype),                        # head outputs
        ],
        compiler_params=pltpu.CompilerParams(
            dimension_semantics=("parallel",),
            vmem_limit_bytes=_vmem_limit_bytes(),
        ),
    )(x, w_qkv_t, b_qkv.reshape(1, 3 * C), w_proj_t, b_proj.reshape(1, C))


def attention_forward(x, params, num_heads):
    """Pallas-backed forward pass of the Attention module. x: (B, N, C)."""
    B, N, C = x.shape
    assert C % num_heads == 0
    hd = C // num_heads
    scale = hd ** (-0.5)

    # PyTorch Linear weights are (out, in): transpose once at wrapper level.
    w_qkv_t = params["w_qkv"].T                                # (C, 3C)
    b_qkv = params["b_qkv"]                                    # (3C,)
    w_proj_t = params["w_proj"].T                              # (C, C)
    b_proj = params["b_proj"]                                  # (C,)

    # Fold the softmax scale into the q columns of W_qkv / b_qkv once
    # (cheap one-time weight transform; removes B*N*C in-kernel multiplies).
    col_scale = jnp.concatenate(
        [jnp.full((C,), scale, dtype=w_qkv_t.dtype),
         jnp.ones((2 * C,), dtype=w_qkv_t.dtype)])
    w_qkv_t = w_qkv_t * col_scale[None, :]
    b_qkv = b_qkv * col_scale.astype(b_qkv.dtype)

    return _pallas_fused_attention(x, w_qkv_t, b_qkv, w_proj_t, b_proj,
                                   num_heads, hd)

    # TODO(synk): attn_drop / proj_drop are p=0.0 (identity); not implemented
    # as RNG dropout.


# --------------------------- reference (pure JAX) ---------------------------

def attention_reference(x, params, num_heads):
    B, N, C = x.shape
    hd = C // num_heads
    scale = hd ** (-0.5)
    qkv = x @ params["w_qkv"].T + params["b_qkv"]
    qkv = qkv.reshape(B, N, 3, num_heads, hd).transpose(2, 0, 3, 1, 4)
    q, k, v = qkv[0], qkv[1], qkv[2]
    attn = jnp.einsum("bhqd,bhkd->bhqk", q, k) * scale
    attn = jax.nn.softmax(attn, axis=-1)
    o = jnp.einsum("bhqk,bhkd->bhqd", attn, v)
    o = o.transpose(0, 2, 1, 3).reshape(B, N, C)
    return o @ params["w_proj"].T + params["b_proj"]


# ----------------------------------- main -----------------------------------

if __name__ == "__main__":
    B, N, C = 2, 8, 32
    num_heads = 8                      # head_dim = 4

    key = jax.random.PRNGKey(0)
    k_x, k_wqkv, k_wproj = jax.random.split(key, 3)

    x = jax.random.normal(k_x, (B, N, C), dtype=jnp.float32)

    params = {
        "w_qkv": 0.02 * jax.random.normal(k_wqkv, (3 * C, C), dtype=jnp.float32),
        "b_qkv": jnp.zeros((3 * C,), dtype=jnp.float32),   # qkv_bias=False
        "w_proj": 0.02 * jax.random.normal(k_wproj, (C, C), dtype=jnp.float32),
        "b_proj": jnp.zeros((C,), dtype=jnp.float32),
    }

    out = jax.jit(attention_forward, static_argnums=2)(x, params, num_heads)
    out = jax.block_until_ready(out)

    ref = attention_reference(x, params, num_heads)
    assert out.shape == (B, N, C)
    # Tolerance accounts for the EUP approximate reciprocal in the softmax
    # and the scale being folded into the qkv weight.
    assert jnp.allclose(out, ref, atol=5e-4, rtol=5e-3), "mismatch vs reference"

    print("KERNEL_OK")
</pallas_src>

<mosaic_0001>
module attributes {stable_mosaic.version = 11 : i64} {
  func.func @_fused_attn_kernel(%arg0: i32, %arg1: memref<1x8x32xf32, #tpu.memory_space<vmem>>, %arg2: memref<32x96xf32, #tpu.memory_space<vmem>>, %arg3: memref<1x96xf32, #tpu.memory_space<vmem>>, %arg4: memref<32x32xf32, #tpu.memory_space<vmem>>, %arg5: memref<1x32xf32, #tpu.memory_space<vmem>>, %arg6: memref<1x8x32xf32, #tpu.memory_space<vmem>>, %arg7: memref<8x96xf32, #tpu.memory_space<vmem>>, %arg8: memref<8x32xf32, #tpu.memory_space<vmem>>) attributes {dimension_semantics = [#tpu.dimension_semantics<parallel>], iteration_bounds = array<i64: 2>, scalar_prefetch = 0 : i64, scratch_operands = 2 : i64, tpu.core_type = #tpu.core_type<tc>, window_params = [{transform_indices = @transform_0, window_bounds = array<i64: 1, 8, 32>}, {pipeline_mode = #tpu.pipeline_mode<synchronous>, transform_indices = @transform_1, window_bounds = array<i64: 32, 96>}, {pipeline_mode = #tpu.pipeline_mode<synchronous>, transform_indices = @transform_2, window_bounds = array<i64: 1, 96>}, {pipeline_mode = #tpu.pipeline_mode<synchronous>, transform_indices = @transform_3, window_bounds = array<i64: 32, 32>}, {pipeline_mode = #tpu.pipeline_mode<synchronous>, transform_indices = @transform_4, window_bounds = array<i64: 1, 32>}, {transform_indices = @transform_5, window_bounds = array<i64: 1, 8, 32>}]} {
    %c0 = arith.constant 0 : index
    %c0_0 = arith.constant 0 : index
    %c0_1 = arith.constant 0 : index
    %0 = vector.load %arg1[%c0, %c0_0, %c0_1] : memref<1x8x32xf32, #tpu.memory_space<vmem>>, vector<1x8x32xf32>
    %1 = vector.shape_cast %0 : vector<1x8x32xf32> to vector<8x32xf32>
    %c0_2 = arith.constant 0 : index
    %c0_3 = arith.constant 0 : index
    %2 = vector.load %arg2[%c0_2, %c0_3] : memref<32x96xf32, #tpu.memory_space<vmem>>, vector<32x96xf32>
    %cst = arith.constant dense<0.000000e+00> : vector<8x96xf32>
    %3 = tpu.matmul %1, %2, %cst {dimension_numbers = #tpu.dot_dimension_numbers<[1], [0], [0], [1], [0, 0, 1, 1], [], []>} : vector<8x32xf32>, vector<32x96xf32>, vector<8x96xf32> -> vector<8x96xf32>
    %c0_4 = arith.constant 0 : index
    %c0_5 = arith.constant 0 : index
    %4 = vector.load %arg3[%c0_4, %c0_5] : memref<1x96xf32, #tpu.memory_space<vmem>>, vector<1x96xf32>
    %5 = vector.broadcast %4 : vector<1x96xf32> to vector<8x96xf32>
    %6 = arith.addf %3, %5 : vector<8x96xf32>
    %c0_6 = arith.constant 0 : index
    %c0_7 = arith.constant 0 : index
    %7 = vector.load %arg7[%c0_6, %c0_7] : memref<8x96xf32, #tpu.memory_space<vmem>>, vector<8x96xf32>
    tpu.vector_store %arg7[%c0_6, %c0_7], %6 {strides = array<i32>} : memref<8x96xf32, #tpu.memory_space<vmem>>, vector<8x96xf32>,
    %c0_8 = arith.constant 0 : index
    %c0_9 = arith.constant 0 : index
    %8 = vector.load %arg7[%c0_8, %c0_9] : memref<8x96xf32, #tpu.memory_space<vmem>>, vector<8x4xf32>
    %c0_10 = arith.constant 0 : index
    %c32 = arith.constant 32 : index
    %9 = vector.load %arg7[%c0_10, %c32] : memref<8x96xf32, #tpu.memory_space<vmem>>, vector<8x4xf32>
    %c0_11 = arith.constant 0 : index
    %c64 = arith.constant 64 : index
    %10 = vector.load %arg7[%c0_11, %c64] : memref<8x96xf32, #tpu.memory_space<vmem>>, vector<8x4xf32>
    %cst_12 = arith.constant dense<0.000000e+00> : vector<8x8xf32>
    %11 = tpu.matmul %8, %9, %cst_12 {dimension_numbers = #tpu.dot_dimension_numbers<[1], [1], [0], [0], [0, 0, 1, 0], [], []>} : vector<8x4xf32>, vector<8x4xf32>, vector<8x8xf32> -> vector<8x8xf32>
    %cst_13 = arith.constant dense<0xFF800000> : vector<8xf32>
    %12 = vector.multi_reduction <maximumf>, %11, %cst_13 [1] : vector<8x8xf32> to vector<8xf32>
    %13 = vector.shape_cast %12 : vector<8xf32> to vector<8x1xf32>
    %14 = vector.broadcast %13 : vector<8x1xf32> to vector<8x8xf32>
    %15 = arith.subf %11, %14 : vector<8x8xf32>
    %16 = math.exp %15 : vector<8x8xf32>
    %cst_14 = arith.constant dense<0.000000e+00> : vector<8xf32>
    %17 = vector.multi_reduction <add>, %16, %cst_14 [1] : vector<8x8xf32> to vector<8xf32>
    %18 = vector.shape_cast %17 : vector<8xf32> to vector<8x1xf32>
    %19 = tpu.reciprocal %18 {approx = true} : vector<8x1xf32> -> vector<8x1xf32>
    %20 = vector.broadcast %19 : vector<8x1xf32> to vector<8x8xf32>
    %21 = arith.mulf %16, %20 : vector<8x8xf32>
    %cst_15 = arith.constant dense<0.000000e+00> : vector<8x4xf32>
    %22 = tpu.matmul %21, %10, %cst_15 {dimension_numbers = #tpu.dot_dimension_numbers<[1], [0], [0], [1], [0, 0, 1, 1], [], []>} : vector<8x8xf32>, vector<8x4xf32>, vector<8x4xf32> -> vector<8x4xf32>
    %c0_16 = arith.constant 0 : index
    %c0_17 = arith.constant 0 : index
    %23 = vector.load %arg8[%c0_16, %c0_17] : memref<8x32xf32, #tpu.memory_space<vmem>>, vector<8x4xf32>
    tpu.vector_store %arg8[%c0_16, %c0_17], %22 {strides = array<i32>} : memref<8x32xf32, #tpu.memory_space<vmem>>, vector<8x4xf32>,
    %c0_18 = arith.constant 0 : index
    %c4 = arith.constant 4 : index
    %24 = vector.load %arg7[%c0_18, %c4] : memref<8x96xf32, #tpu.memory_space<vmem>>, vector<8x4xf32>
    %c0_19 = arith.constant 0 : index
    %c36 = arith.constant 36 : index
    %25 = vector.load %arg7[%c0_19, %c36] : memref<8x96xf32, #tpu.memory_space<vmem>>, vector<8x4xf32>
    %c0_20 = arith.constant 0 : index
    %c68 = arith.constant 68 : index
    %26 = vector.load %arg7[%c0_20, %c68] : memref<8x96xf32, #tpu.memory_space<vmem>>, vector<8x4xf32>
    %cst_21 = arith.constant dense<0.000000e+00> : vector<8x8xf32>
    %27 = tpu.matmul %24, %25, %cst_21 {dimension_numbers = #tpu.dot_dimension_numbers<[1], [1], [0], [0], [0, 0, 1, 0], [], []>} : vector<8x4xf32>, vector<8x4xf32>, vector<8x8xf32> -> vector<8x8xf32>
    %cst_22 = arith.constant dense<0xFF800000> : vector<8xf32>
    %28 = vector.multi_reduction <maximumf>, %27, %cst_22 [1] : vector<8x8xf32> to vector<8xf32>
    %29 = vector.shape_cast %28 : vector<8xf32> to vector<8x1xf32>
    %30 = vector.broadcast %29 : vector<8x1xf32> to vector<8x8xf32>
    %31 = arith.subf %27, %30 : vector<8x8xf32>
    %32 = math.exp %31 : vector<8x8xf32>
    %cst_23 = arith.constant dense<0.000000e+00> : vector<8xf32>
    %33 = vector.multi_reduction <add>, %32, %cst_23 [1] : vector<8x8xf32> to vector<8xf32>
    %34 = vector.shape_cast %33 : vector<8xf32> to vector<8x1xf32>
    %35 = tpu.reciprocal %34 {approx = true} : vector<8x1xf32> -> vector<8x1xf32>
    %36 = vector.broadcast %35 : vector<8x1xf32> to vector<8x8xf32>
    %37 = arith.mulf %32, %36 : vector<8x8xf32>
    %cst_24 = arith.constant dense<0.000000e+00> : vector<8x4xf32>
    %38 = tpu.matmul %37, %26, %cst_24 {dimension_numbers = #tpu.dot_dimension_numbers<[1], [0], [0], [1], [0, 0, 1, 1], [], []>} : vector<8x8xf32>, vector<8x4xf32>, vector<8x4xf32> -> vector<8x4xf32>
    %c0_25 = arith.constant 0 : index
    %c4_26 = arith.constant 4 : index
    %39 = vector.load %arg8[%c0_25, %c4_26] : memref<8x32xf32, #tpu.memory_space<vmem>>, vector<8x4xf32>
    tpu.vector_store %arg8[%c0_25, %c4_26], %38 {strides = array<i32>} : memref<8x32xf32, #tpu.memory_space<vmem>>, vector<8x4xf32>,
    %c0_27 = arith.constant 0 : index
    %c8 = arith.constant 8 : index
    %40 = vector.load %arg7[%c0_27, %c8] : memref<8x96xf32, #tpu.memory_space<vmem>>, vector<8x4xf32>
    %c0_28 = arith.constant 0 : index
    %c40 = arith.constant 40 : index
    %41 = vector.load %arg7[%c0_28, %c40] : memref<8x96xf32, #tpu.memory_space<vmem>>, vector<8x4xf32>
    %c0_29 = arith.constant 0 : index
    %c72 = arith.constant 72 : index
    %42 = vector.load %arg7[%c0_29, %c72] : memref<8x96xf32, #tpu.memory_space<vmem>>, vector<8x4xf32>
    %cst_30 = arith.constant dense<0.000000e+00> : vector<8x8xf32>
    %43 = tpu.matmul %40, %41, %cst_30 {dimension_numbers = #tpu.dot_dimension_numbers<[1], [1], [0], [0], [0, 0, 1, 0], [], []>} : vector<8x4xf32>, vector<8x4xf32>, vector<8x8xf32> -> vector<8x8xf32>
    %cst_31 = arith.constant dense<0xFF800000> : vector<8xf32>
    %44 = vector.multi_reduction <maximumf>, %43, %cst_31 [1] : vector<8x8xf32> to vector<8xf32>
    %45 = vector.shape_cast %44 : vector<8xf32> to vector<8x1xf32>
    %46 = vector.broadcast %45 : vector<8x1xf32> to vector<8x8xf32>
    %47 = arith.subf %43, %46 : vector<8x8xf32>
    %48 = math.exp %47 : vector<8x8xf32>
    %cst_32 = arith.constant dense<0.000000e+00> : vector<8xf32>
    %49 = vector.multi_reduction <add>, %48, %cst_32 [1] : vector<8x8xf32> to vector<8xf32>
    %50 = vector.shape_cast %49 : vector<8xf32> to vector<8x1xf32>
    %51 = tpu.reciprocal %50 {approx = true} : vector<8x1xf32> -> vector<8x1xf32>
    %52 = vector.broadcast %51 : vector<8x1xf32> to vector<8x8xf32>
    %53 = arith.mulf %48, %52 : vector<8x8xf32>
    %cst_33 = arith.constant dense<0.000000e+00> : vector<8x4xf32>
    %54 = tpu.matmul %53, %42, %cst_33 {dimension_numbers = #tpu.dot_dimension_numbers<[1], [0], [0], [1], [0, 0, 1, 1], [], []>} : vector<8x8xf32>, vector<8x4xf32>, vector<8x4xf32> -> vector<8x4xf32>
    %c0_34 = arith.constant 0 : index
    %c8_35 = arith.constant 8 : index
    %55 = vector.load %arg8[%c0_34, %c8_35] : memref<8x32xf32, #tpu.memory_space<vmem>>, vector<8x4xf32>
    tpu.vector_store %arg8[%c0_34, %c8_35], %54 {strides = array<i32>} : memref<8x32xf32, #tpu.memory_space<vmem>>, vector<8x4xf32>,
    %c0_36 = arith.constant 0 : index
    %c12 = arith.constant 12 : index
    %56 = vector.load %arg7[%c0_36, %c12] : memref<8x96xf32, #tpu.memory_space<vmem>>, vector<8x4xf32>
    %c0_37 = arith.constant 0 : index
    %c44 = arith.constant 44 : index
    %57 = vector.load %arg7[%c0_37, %c44] : memref<8x96xf32, #tpu.memory_space<vmem>>, vector<8x4xf32>
    %c0_38 = arith.constant 0 : index
    %c76 = arith.constant 76 : index
    %58 = vector.load %arg7[%c0_38, %c76] : memref<8x96xf32, #tpu.memory_space<vmem>>, vector<8x4xf32>
    %cst_39 = arith.constant dense<0.000000e+00> : vector<8x8xf32>
    %59 = tpu.matmul %56, %57, %cst_39 {dimension_numbers = #tpu.dot_dimension_numbers<[1], [1], [0], [0], [0, 0, 1, 0], [], []>} : vector<8x4xf32>, vector<8x4xf32>, vector<8x8xf32> -> vector<8x8xf32>
    %cst_40 = arith.constant dense<0xFF800000> : vector<8xf32>
    %60 = vector.multi_reduction <maximumf>, %59, %cst_40 [1] : vector<8x8xf32> to vector<8xf32>
    %61 = vector.shape_cast %60 : vector<8xf32> to vector<8x1xf32>
    %62 = vector.broadcast %61 : vector<8x1xf32> to vector<8x8xf32>
    %63 = arith.subf %59, %62 : vector<8x8xf32>
    %64 = math.exp %63 : vector<8x8xf32>
    %cst_41 = arith.constant dense<0.000000e+00> : vector<8xf32>
    %65 = vector.multi_reduction <add>, %64, %cst_41 [1] : vector<8x8xf32> to vector<8xf32>
    %66 = vector.shape_cast %65 : vector<8xf32> to vector<8x1xf32>
    %67 = tpu.reciprocal %66 {approx = true} : vector<8x1xf32> -> vector<8x1xf32>
    %68 = vector.broadcast %67 : vector<8x1xf32> to vector<8x8xf32>
    %69 = arith.mulf %64, %68 : vector<8x8xf32>
    %cst_42 = arith.constant dense<0.000000e+00> : vector<8x4xf32>
    %70 = tpu.matmul %69, %58, %cst_42 {dimension_numbers = #tpu.dot_dimension_numbers<[1], [0], [0], [1], [0, 0, 1, 1], [], []>} : vector<8x8xf32>, vector<8x4xf32>, vector<8x4xf32> -> vector<8x4xf32>
    %c0_43 = arith.constant 0 : index
    %c12_44 = arith.constant 12 : index
    %71 = vector.load %arg8[%c0_43, %c12_44] : memref<8x32xf32, #tpu.memory_space<vmem>>, vector<8x4xf32>
    tpu.vector_store %arg8[%c0_43, %c12_44], %70 {strides = array<i32>} : memref<8x32xf32, #tpu.memory_space<vmem>>, vector<8x4xf32>,
    %c0_45 = arith.constant 0 : index
    %c16 = arith.constant 16 : index
    %72 = vector.load %arg7[%c0_45, %c16] : memref<8x96xf32, #tpu.memory_space<vmem>>, vector<8x4xf32>
    %c0_46 = arith.constant 0 : index
    %c48 = arith.constant 48 : index
    %73 = vector.load %arg7[%c0_46, %c48] : memref<8x96xf32, #tpu.memory_space<vmem>>, vector<8x4xf32>
    %c0_47 = arith.constant 0 : index
    %c80 = arith.constant 80 : index
    %74 = vector.load %arg7[%c0_47, %c80] : memref<8x96xf32, #tpu.memory_space<vmem>>, vector<8x4xf32>
    %cst_48 = arith.constant dense<0.000000e+00> : vector<8x8xf32>
    %75 = tpu.matmul %72, %73, %cst_48 {dimension_numbers = #tpu.dot_dimension_numbers<[1], [1], [0], [0], [0, 0, 1, 0], [], []>} : vector<8x4xf32>, vector<8x4xf32>, vector<8x8xf32> -> vector<8x8xf32>
    %cst_49 = arith.constant dense<0xFF800000> : vector<8xf32>
    %76 = vector.multi_reduction <maximumf>, %75, %cst_49 [1] : vector<8x8xf32> to vector<8xf32>
    %77 = vector.shape_cast %76 : vector<8xf32> to vector<8x1xf32>
    %78 = vector.broadcast %77 : vector<8x1xf32> to vector<8x8xf32>
    %79 = arith.subf %75, %78 : vector<8x8xf32>
    %80 = math.exp %79 : vector<8x8xf32>
    %cst_50 = arith.constant dense<0.000000e+00> : vector<8xf32>
    %81 = vector.multi_reduction <add>, %80, %cst_50 [1] : vector<8x8xf32> to vector<8xf32>
    %82 = vector.shape_cast %81 : vector<8xf32> to vector<8x1xf32>
    %83 = tpu.reciprocal %82 {approx = true} : vector<8x1xf32> -> vector<8x1xf32>
    %84 = vector.broadcast %83 : vector<8x1xf32> to vector<8x8xf32>
    %85 = arith.mulf %80, %84 : vector<8x8xf32>
    %cst_51 = arith.constant dense<0.000000e+00> : vector<8x4xf32>
    %86 = tpu.matmul %85, %74, %cst_51 {dimension_numbers = #tpu.dot_dimension_numbers<[1], [0], [0], [1], [0, 0, 1, 1], [], []>} : vector<8x8xf32>, vector<8x4xf32>, vector<8x4xf32> -> vector<8x4xf32>
    %c0_52 = arith.constant 0 : index
    %c16_53 = arith.constant 16 : index
    %87 = vector.load %arg8[%c0_52, %c16_53] : memref<8x32xf32, #tpu.memory_space<vmem>>, vector<8x4xf32>
    tpu.vector_store %arg8[%c0_52, %c16_53], %86 {strides = array<i32>} : memref<8x32xf32, #tpu.memory_space<vmem>>, vector<8x4xf32>,
    %c0_54 = arith.constant 0 : index
    %c20 = arith.constant 20 : index
    %88 = vector.load %arg7[%c0_54, %c20] : memref<8x96xf32, #tpu.memory_space<vmem>>, vector<8x4xf32>
    %c0_55 = arith.constant 0 : index
    %c52 = arith.constant 52 : index
    %89 = vector.load %arg7[%c0_55, %c52] : memref<8x96xf32, #tpu.memory_space<vmem>>, vector<8x4xf32>
    %c0_56 = arith.constant 0 : index
    %c84 = arith.constant 84 : index
    %90 = vector.load %arg7[%c0_56, %c84] : memref<8x96xf32, #tpu.memory_space<vmem>>, vector<8x4xf32>
    %cst_57 = arith.constant dense<0.000000e+00> : vector<8x8xf32>
    %91 = tpu.matmul %88, %89, %cst_57 {dimension_numbers = #tpu.dot_dimension_numbers<[1], [1], [0], [0], [0, 0, 1, 0], [], []>} : vector<8x4xf32>, vector<8x4xf32>, vector<8x8xf32> -> vector<8x8xf32>
    %cst_58 = arith.constant dense<0xFF800000> : vector<8xf32>
    %92 = vector.multi_reduction <maximumf>, %91, %cst_58 [1] : vector<8x8xf32> to vector<8xf32>
    %93 = vector.shape_cast %92 : vector<8xf32> to vector<8x1xf32>
    %94 = vector.broadcast %93 : vector<8x1xf32> to vector<8x8xf32>
    %95 = arith.subf %91, %94 : vector<8x8xf32>
    %96 = math.exp %95 : vector<8x8xf32>
    %cst_59 = arith.constant dense<0.000000e+00> : vector<8xf32>
    %97 = vector.multi_reduction <add>, %96, %cst_59 [1] : vector<8x8xf32> to vector<8xf32>
    %98 = vector.shape_cast %97 : vector<8xf32> to vector<8x1xf32>
    %99 = tpu.reciprocal %98 {approx = true} : vector<8x1xf32> -> vector<8x1xf32>
    %100 = vector.broadcast %99 : vector<8x1xf32> to vector<8x8xf32>
    %101 = arith.mulf %96, %100 : vector<8x8xf32>
    %cst_60 = arith.constant dense<0.000000e+00> : vector<8x4xf32>
    %102 = tpu.matmul %101, %90, %cst_60 {dimension_numbers = #tpu.dot_dimension_numbers<[1], [0], [0], [1], [0, 0, 1, 1], [], []>} : vector<8x8xf32>, vector<8x4xf32>, vector<8x4xf32> -> vector<8x4xf32>
    %c0_61 = arith.constant 0 : index
    %c20_62 = arith.constant 20 : index
    %103 = vector.load %arg8[%c0_61, %c20_62] : memref<8x32xf32, #tpu.memory_space<vmem>>, vector<8x4xf32>
    tpu.vector_store %arg8[%c0_61, %c20_62], %102 {strides = array<i32>} : memref<8x32xf32, #tpu.memory_space<vmem>>, vector<8x4xf32>,
    %c0_63 = arith.constant 0 : index
    %c24 = arith.constant 24 : index
    %104 = vector.load %arg7[%c0_63, %c24] : memref<8x96xf32, #tpu.memory_space<vmem>>, vector<8x4xf32>
    %c0_64 = arith.constant 0 : index
    %c56 = arith.constant 56 : index
    %105 = vector.load %arg7[%c0_64, %c56] : memref<8x96xf32, #tpu.memory_space<vmem>>, vector<8x4xf32>
    %c0_65 = arith.constant 0 : index
    %c88 = arith.constant 88 : index
    %106 = vector.load %arg7[%c0_65, %c88] : memref<8x96xf32, #tpu.memory_space<vmem>>, vector<8x4xf32>
    %cst_66 = arith.constant dense<0.000000e+00> : vector<8x8xf32>
    %107 = tpu.matmul %104, %105, %cst_66 {dimension_numbers = #tpu.dot_dimension_numbers<[1], [1], [0], [0], [0, 0, 1, 0], [], []>} : vector<8x4xf32>, vector<8x4xf32>, vector<8x8xf32> -> vector<8x8xf32>
    %cst_67 = arith.constant dense<0xFF800000> : vector<8xf32>
    %108 = vector.multi_reduction <maximumf>, %107, %cst_67 [1] : vector<8x8xf32> to vector<8xf32>
    %109 = vector.shape_cast %108 : vector<8xf32> to vector<8x1xf32>
    %110 = vector.broadcast %109 : vector<8x1xf32> to vector<8x8xf32>
    %111 = arith.subf %107, %110 : vector<8x8xf32>
    %112 = math.exp %111 : vector<8x8xf32>
    %cst_68 = arith.constant dense<0.000000e+00> : vector<8xf32>
    %113 = vector.multi_reduction <add>, %112, %cst_68 [1] : vector<8x8xf32> to vector<8xf32>
    %114 = vector.shape_cast %113 : vector<8xf32> to vector<8x1xf32>
    %115 = tpu.reciprocal %114 {approx = true} : vector<8x1xf32> -> vector<8x1xf32>
    %116 = vector.broadcast %115 : vector<8x1xf32> to vector<8x8xf32>
    %117 = arith.mulf %112, %116 : vector<8x8xf32>
    %cst_69 = arith.constant dense<0.000000e+00> : vector<8x4xf32>
    %118 = tpu.matmul %117, %106, %cst_69 {dimension_numbers = #tpu.dot_dimension_numbers<[1], [0], [0], [1], [0, 0, 1, 1], [], []>} : vector<8x8xf32>, vector<8x4xf32>, vector<8x4xf32> -> vector<8x4xf32>
    %c0_70 = arith.constant 0 : index
    %c24_71 = arith.constant 24 : index
    %119 = vector.load %arg8[%c0_70, %c24_71] : memref<8x32xf32, #tpu.memory_space<vmem>>, vector<8x4xf32>
    tpu.vector_store %arg8[%c0_70, %c24_71], %118 {strides = array<i32>} : memref<8x32xf32, #tpu.memory_space<vmem>>, vector<8x4xf32>,
    %c0_72 = arith.constant 0 : index
    %c28 = arith.constant 28 : index
    %120 = vector.load %arg7[%c0_72, %c28] : memref<8x96xf32, #tpu.memory_space<vmem>>, vector<8x4xf32>
    %c0_73 = arith.constant 0 : index
    %c60 = arith.constant 60 : index
    %121 = vector.load %arg7[%c0_73, %c60] : memref<8x96xf32, #tpu.memory_space<vmem>>, vector<8x4xf32>
    %c0_74 = arith.constant 0 : index
    %c92 = arith.constant 92 : index
    %122 = vector.load %arg7[%c0_74, %c92] : memref<8x96xf32, #tpu.memory_space<vmem>>, vector<8x4xf32>
    %cst_75 = arith.constant dense<0.000000e+00> : vector<8x8xf32>
    %123 = tpu.matmul %120, %121, %cst_75 {dimension_numbers = #tpu.dot_dimension_numbers<[1], [1], [0], [0], [0, 0, 1, 0], [], []>} : vector<8x4xf32>, vector<8x4xf32>, vector<8x8xf32> -> vector<8x8xf32>
    %cst_76 = arith.constant dense<0xFF800000> : vector<8xf32>
    %124 = vector.multi_reduction <maximumf>, %123, %cst_76 [1] : vector<8x8xf32> to vector<8xf32>
    %125 = vector.shape_cast %124 : vector<8xf32> to vector<8x1xf32>
    %126 = vector.broadcast %125 : vector<8x1xf32> to vector<8x8xf32>
    %127 = arith.subf %123, %126 : vector<8x8xf32>
    %128 = math.exp %127 : vector<8x8xf32>
    %cst_77 = arith.constant dense<0.000000e+00> : vector<8xf32>
    %129 = vector.multi_reduction <add>, %128, %cst_77 [1] : vector<8x8xf32> to vector<8xf32>
    %130 = vector.shape_cast %129 : vector<8xf32> to vector<8x1xf32>
    %131 = tpu.reciprocal %130 {approx = true} : vector<8x1xf32> -> vector<8x1xf32>
    %132 = vector.broadcast %131 : vector<8x1xf32> to vector<8x8xf32>
    %133 = arith.mulf %128, %132 : vector<8x8xf32>
    %cst_78 = arith.constant dense<0.000000e+00> : vector<8x4xf32>
    %134 = tpu.matmul %133, %122, %cst_78 {dimension_numbers = #tpu.dot_dimension_numbers<[1], [0], [0], [1], [0, 0, 1, 1], [], []>} : vector<8x8xf32>, vector<8x4xf32>, vector<8x4xf32> -> vector<8x4xf32>
    %c0_79 = arith.constant 0 : index
    %c28_80 = arith.constant 28 : index
    %135 = vector.load %arg8[%c0_79, %c28_80] : memref<8x32xf32, #tpu.memory_space<vmem>>, vector<8x4xf32>
    tpu.vector_store %arg8[%c0_79, %c28_80], %134 {strides = array<i32>} : memref<8x32xf32, #tpu.memory_space<vmem>>, vector<8x4xf32>,
    %c0_81 = arith.constant 0 : index
    %c0_82 = arith.constant 0 : index
    %136 = vector.load %arg8[%c0_81, %c0_82] : memref<8x32xf32, #tpu.memory_space<vmem>>, vector<8x32xf32>
    %c0_83 = arith.constant 0 : index
    %c0_84 = arith.constant 0 : index
    %137 = vector.load %arg4[%c0_83, %c0_84] : memref<32x32xf32, #tpu.memory_space<vmem>>, vector<32x32xf32>
    %cst_85 = arith.constant dense<0.000000e+00> : vector<8x32xf32>
    %138 = tpu.matmul %136, %137, %cst_85 {dimension_numbers = #tpu.dot_dimension_numbers<[1], [0], [0], [1], [0, 0, 1, 1], [], []>} : vector<8x32xf32>, vector<32x32xf32>, vector<8x32xf32> -> vector<8x32xf32>
    %c0_86 = arith.constant 0 : index
    %c0_87 = arith.constant 0 : index
    %139 = vector.load %arg5[%c0_86, %c0_87] : memref<1x32xf32, #tpu.memory_space<vmem>>, vector<1x32xf32>
    %140 = vector.broadcast %139 : vector<1x32xf32> to vector<8x32xf32>
    %141 = arith.addf %138, %140 : vector<8x32xf32>
    %c0_88 = arith.constant 0 : index
    %c0_89 = arith.constant 0 : index
    %c0_90 = arith.constant 0 : index
    %142 = vector.load %arg6[%c0_88, %c0_89, %c0_90] : memref<1x8x32xf32, #tpu.memory_space<vmem>>, vector<1x8x32xf32>
    %143 = vector.shape_cast %142 : vector<1x8x32xf32> to vector<8x32xf32>
    %144 = vector.shape_cast %141 : vector<8x32xf32> to vector<1x8x32xf32>
    tpu.vector_store %arg6[%c0_88, %c0_89, %c0_90], %144 {strides = array<i32>} : memref<1x8x32xf32, #tpu.memory_space<vmem>>, vector<1x8x32xf32>,
    return
  }
  func.func @transform_0(%arg0: i32) -> (i32, i32, i32) {
    %c0_i32 = arith.constant 0 : i32
    %c0_i32_0 = arith.constant 0 : i32
    %c0_i32_1 = arith.constant 0 : i32
    return %arg0, %c0_i32, %c0_i32_0 : i32, i32, i32
  }
  func.func @transform_1(%arg0: i32) -> (i32, i32) {
    %c0_i32 = arith.constant 0 : i32
    %c0_i32_0 = arith.constant 0 : i32
    %c0_i32_1 = arith.constant 0 : i32
    return %c0_i32, %c0_i32_0 : i32, i32
  }
  func.func @transform_2(%arg0: i32) -> (i32, i32) {
    %c0_i32 = arith.constant 0 : i32
    %c0_i32_0 = arith.constant 0 : i32
    %c0_i32_1 = arith.constant 0 : i32
    return %c0_i32, %c0_i32_0 : i32, i32
  }
  func.func @transform_3(%arg0: i32) -> (i32, i32) {
    %c0_i32 = arith.constant 0 : i32
    %c0_i32_0 = arith.constant 0 : i32
    %c0_i32_1 = arith.constant 0 : i32
    return %c0_i32, %c0_i32_0 : i32, i32
  }
  func.func @transform_4(%arg0: i32) -> (i32, i32) {
    %c0_i32 = arith.constant 0 : i32
    %c0_i32_0 = arith.constant 0 : i32
    %c0_i32_1 = arith.constant 0 : i32
    return %c0_i32, %c0_i32_0 : i32, i32
  }
  func.func @transform_5(%arg0: i32) -> (i32, i32, i32) {
    %c0_i32 = arith.constant 0 : i32
    %c0_i32_0 = arith.constant 0 : i32
    %c0_i32_1 = arith.constant 0 : i32
    return %arg0, %c0_i32, %c0_i32_0 : i32, i32, i32
  }
}

</mosaic_0001>

<llo_original>
// kernel: attention_forward.1
$region0: #{attention_forward.1}
  #allocation0 [shape = 'u32[]', space=smem, size = 0x4, offset = 0x4, fixed_abs, tag = 'smem constant byte address 0x4 - core index']
  #allocation1 [shape = 'u32[144,128]{1,0:T(1,128)}', space=vmem, size = 0x12000, scoped, tag = 'internal scratch']
  #allocation2 [shape = 'f32[8,96]{1,0:T(8,128)}', space=vmem, size = 0x1000, scoped, tag = 'scratch operand']
  #allocation3 [shape = 'f32[8,32]{1,0:T(8,128)}', space=vmem, size = 0x1000, scoped, tag = 'scratch operand']
  %s0 = inlined_call_operand.vmem [shape: f32[2,8,32], index: 0, kind: input, shape index: {}]
  %s1 = inlined_call_operand.vmem [shape: f32[32,96], index: 1, kind: input, shape index: {}]
  %s2 = inlined_call_operand.vmem [shape: f32[1,96], index: 2, kind: input, shape index: {}]
  %s3 = inlined_call_operand.vmem [shape: f32[32,32], index: 3, kind: input, shape index: {}]
  %s4 = inlined_call_operand.vmem [shape: f32[1,32], index: 4, kind: input, shape index: {}]
  %s5 = inlined_call_operand.hbm [shape: f32[2,8,32], index: 5, kind: output, shape index: {}]
  %s6 = sld [smem:[#allocation0]]
  $region53: #{attention_forward.1} parent=0
    _
  %s8 = ssub.s32 1, %s6
  %s9 = scalar_select 0, %s8, %s6
  $region1: #{attention_forward.1} parent=0
    #allocation4 [shape = 'u8[8192]{0}', space=vmem, size = 0x2000, scoped, tag = 'output window, operand 0']
    #allocation5 [shape = 's32[2]{0}', space=sflag, size = 0x8, scoped, tag = 'scoped memory for attention_forward.1']
    %10 = vsyncpa [#allocation5], 0
    %s11 = scalar_lea.sflag [#allocation5], 1
    %12 = vsyncpa %s11, 0
    loop: start=0, step=1, limit=4
    $region2: #{attention_forward.1} parent=1 // loop_pre_header
      _
    $region3: #{attention_forward.1} parent=1 // loop_header
      %s14 = sphi 0, %s18
      %p15 = scmp.ge.s32.totalorder %s14, 4
      %s24 = sphi 0, %s26
      %s27 = sphi 0, %s24
      %s28 = sphi 0, %s27
      %s44 = sphi 0, %s28
      %s48 = sphi 0, %s48
      %s50 = sphi 0, %s48
      %s51 = sphi 0, %s50
      %s65 = sphi 0, %s51
      %s69 = sphi 0, %s69
      %s71 = sphi 0, %s69
      %s72 = sphi 0, %s71
      %s86 = sphi 0, %s72
      %s90 = sphi 0, %s90
      %s92 = sphi 0, %s90
      %s93 = sphi 0, %s92
      %s107 = sphi 0, %s93
      %s111 = sphi 0, %s111
      %s113 = sphi 0, %s111
      %s114 = sphi 0, %s113
      %s128 = sphi 0, %s114
      %s134 = sphi 0, %s136
      %s137 = sphi 0, %s134
      %s138 = sphi 0, %s137
      %s154 = sphi 0, %s138
    $region4: #{attention_forward.1} parent=1 // loop_header_branch
      %17 = sbr.rel (%p15) target = $region8
    $region5: #{attention_forward.1} parent=1 // loop_body
      %s19 = ssub.s32 %s14, 1
      %s20 = ssub.s32 %s14, 2
      %s21 = sadd.s32 %s14, 1
      %s22 = ssub.s32 %s14, %s21
      %p23 = scmp.eq.s32.totalorder %s22, 0
      %s25 = sadd.s32 %s24, 1
      %s26 = scalar_select %p23, %s24, %s25
      %p29 = pneg %p23
      %p30 = scmp.eq.s32.totalorder %s14, 1
      %p31 = por %p29, %p30
      %p32 = scmp.ne.s32.totalorder %s24, %s27
      %p33 = scmp.eq.s32.totalorder %s14, 0
      %p34 = por %p32, %p33
      %p35 = scmp.ne.s32.totalorder %s24, %s27
      %p36 = scmp.eq.s32.totalorder %s19, 1
      %p37 = por %p35, %p36
      %p38 = scmp.ne.s32.totalorder %s27, %s28
      %p39 = scmp.eq.s32.totalorder %s19, 0
      %p40 = por %p38, %p39
      %p41 = scmp.ne.s32.totalorder %s27, %s28
      %p42 = scmp.eq.s32.totalorder %s20, 1
      %p43 = por %p41, %p42
      %p45 = scmp.ne.s32.totalorder %s28, %s44
      %p46 = scmp.eq.s32.totalorder %s20, 0
      %p47 = por %p45, %p46
      %s49 = sadd.s32 %s48, 1
      %p52 = scmp.eq.s32.totalorder %s14, 1
      %p53 = scmp.ne.s32.totalorder %s48, %s50
      %p54 = scmp.eq.s32.totalorder %s14, 0
      %p55 = por %p53, %p54
      %p56 = scmp.ne.s32.totalorder %s48, %s50
      %p57 = scmp.eq.s32.totalorder %s19, 1
      %p58 = por %p56, %p57
      %p59 = scmp.ne.s32.totalorder %s50, %s51
      %p60 = scmp.eq.s32.totalorder %s19, 0
      %p61 = por %p59, %p60
      %p62 = scmp.ne.s32.totalorder %s50, %s51
      %p63 = scmp.eq.s32.totalorder %s20, 1
      %p64 = por %p62, %p63
      %p66 = scmp.ne.s32.totalorder %s51, %s65
      %p67 = scmp.eq.s32.totalorder %s20, 0
      %p68 = por %p66, %p67
      %s70 = sadd.s32 %s69, 1
      %p73 = scmp.eq.s32.totalorder %s14, 1
      %p74 = scmp.ne.s32.totalorder %s69, %s71
      %p75 = scmp.eq.s32.totalorder %s14, 0
      %p76 = por %p74, %p75
      %p77 = scmp.ne.s32.totalorder %s69, %s71
      %p78 = scmp.eq.s32.totalorder %s19, 1
      %p79 = por %p77, %p78
      %p80 = scmp.ne.s32.totalorder %s71, %s72
      %p81 = scmp.eq.s32.totalorder %s19, 0
      %p82 = por %p80, %p81
      %p83 = scmp.ne.s32.totalorder %s71, %s72
      %p84 = scmp.eq.s32.totalorder %s20, 1
      %p85 = por %p83, %p84
      %p87 = scmp.ne.s32.totalorder %s72, %s86
      %p88 = scmp.eq.s32.totalorder %s20, 0
      %p89 = por %p87, %p88
      %s91 = sadd.s32 %s90, 1
      %p94 = scmp.eq.s32.totalorder %s14, 1
      %p95 = scmp.ne.s32.totalorder %s90, %s92
      %p96 = scmp.eq.s32.totalorder %s14, 0
      %p97 = por %p95, %p96
      %p98 = scmp.ne.s32.totalorder %s90, %s92
      %p99 = scmp.eq.s32.totalorder %s19, 1
      %p100 = por %p98, %p99
      %p101 = scmp.ne.s32.totalorder %s92, %s93
      %p102 = scmp.eq.s32.totalorder %s19, 0
      %p103 = por %p101, %p102
      %p104 = scmp.ne.s32.totalorder %s92, %s93
      %p105 = scmp.eq.s32.totalorder %s20, 1
      %p106 = por %p104, %p105
      %p108 = scmp.ne.s32.totalorder %s93, %s107
      %p109 = scmp.eq.s32.totalorder %s20, 0
      %p110 = por %p108, %p109
      %s112 = sadd.s32 %s111, 1
      %p115 = scmp.eq.s32.totalorder %s14, 1
      %p116 = scmp.ne.s32.totalorder %s111, %s113
      %p117 = scmp.eq.s32.totalorder %s14, 0
      %p118 = por %p116, %p117
      %p119 = scmp.ne.s32.totalorder %s111, %s113
      %p120 = scmp.eq.s32.totalorder %s19, 1
      %p121 = por %p119, %p120
      %p122 = scmp.ne.s32.totalorder %s113, %s114
      %p123 = scmp.eq.s32.totalorder %s19, 0
      %p124 = por %p122, %p123
      %p125 = scmp.ne.s32.totalorder %s113, %s114
      %p126 = scmp.eq.s32.totalorder %s20, 1
      %p127 = por %p125, %p126
      %p129 = scmp.ne.s32.totalorder %s114, %s128
      %p130 = scmp.eq.s32.totalorder %s20, 0
      %p131 = por %p129, %p130
      %s132 = ssub.s32 %s14, %s21
      %p133 = scmp.eq.s32.totalorder %s132, 0
      %s135 = sadd.s32 %s134, 1
      %s136 = scalar_select %p133, %s134, %s135
      %p139 = pneg %p133
      %p140 = scmp.eq.s32.totalorder %s14, 1
      %p141 = por %p139, %p140
      %p142 = scmp.ne.s32.totalorder %s134, %s137
      %p143 = scmp.eq.s32.totalorder %s14, 0
      %p144 = por %p142, %p143
      %p145 = scmp.ne.s32.totalorder %s134, %s137
      %p146 = scmp.eq.s32.totalorder %s19, 1
      %p147 = por %p145, %p146
      %p148 = scmp.ne.s32.totalorder %s137, %s138
      %p149 = scmp.eq.s32.totalorder %s19, 0
      %p150 = por %p148, %p149
      %p151 = scmp.ne.s32.totalorder %s137, %s138
      %p152 = scmp.eq.s32.totalorder %s20, 1
      %p153 = por %p151, %p152
      %p155 = scmp.ne.s32.totalorder %s138, %s154
      %p156 = scmp.eq.s32.totalorder %s20, 0
      %p157 = por %p155, %p156
      %p158 = scmp.le.s32.totalorder 1, %s14
      %p159 = scmp.lt.s32.totalorder %s14, 3
      %p160 = pnand %p158, %p159
      %p161 = pneg %p160
      // Predicated region
      $region9: #{attention_forward.1} parent=5 // pred_check
        _
      $region10: #{attention_forward.1} parent=5 // pred_check_branch
        %163 = sbr.rel (%p160) target = $region12
      $region11: #{attention_forward.1} parent=5 // pred_region
        %s164 = ssub.s32 %s14, 1
        // Predicated region
        $region13: #{attention_forward.1} parent=11 // pred_check
          %p165 = pneg %p61
        $region14: #{attention_forward.1} parent=11 // pred_check_branch
          %167 = sbr.rel (%p165) target = $region16
        $region15: #{attention_forward.1} parent=11 // pred_region
          _
        $region16: #{attention_forward.1} parent=11 // pred_fallthru
          _
        // Predicated region
        $region17: #{attention_forward.1} parent=11 // pred_check
          %p168 = pneg %p82
        $region18: #{attention_forward.1} parent=11 // pred_check_branch
          %170 = sbr.rel (%p168) target = $region20
        $region19: #{attention_forward.1} parent=11 // pred_region
          _
        $region20: #{attention_forward.1} parent=11 // pred_fallthru
          _
        // Predicated region
        $region21: #{attention_forward.1} parent=11 // pred_check
          %p171 = pneg %p103
        $region22: #{attention_forward.1} parent=11 // pred_check_branch
          %173 = sbr.rel (%p171) target = $region24
        $region23: #{attention_forward.1} parent=11 // pred_region
          _
        $region24: #{attention_forward.1} parent=11 // pred_fallthru
          _
        // Predicated region
        $region25: #{attention_forward.1} parent=11 // pred_check
          %p174 = pneg %p124
        $region26: #{attention_forward.1} parent=11 // pred_check_branch
          %176 = sbr.rel (%p174) target = $region28
        $region27: #{attention_forward.1} parent=11 // pred_region
          _
        $region28: #{attention_forward.1} parent=11 // pred_fallthru
          _
      $region12: #{attention_forward.1} parent=5 // pred_fallthru
        _
      %p177 = scmp.lt.s32.totalorder %s14, 2
      // Predicated region
      $region29: #{attention_forward.1} parent=5 // pred_check
        %p178 = pneg %p177
      $region30: #{attention_forward.1} parent=5 // pred_check_branch
        %180 = sbr.rel (%p178) target = $region32
      $region31: #{attention_forward.1} parent=5 // pred_region
        // Predicated region
        $region33: #{attention_forward.1} parent=31 // pred_check
          %p181 = pneg %p34
        $region34: #{attention_forward.1} parent=31 // pred_check_branch
          %183 = sbr.rel (%p181) target = $region36
        $region35: #{attention_forward.1} parent=31 // pred_region
          %p184 = scmp.lt.s32.totalorder %s14, 1
          %s185 = scalar_select %p184, %s14, 1
          %s186 = smul.addr %s185, 8
          %s187 = scalar_lea.vmem %s0, %s186
        $region36: #{attention_forward.1} parent=31 // pred_fallthru
          _
      $region32: #{attention_forward.1} parent=5 // pred_fallthru
        _
      %p188 = scmp.le.s32.totalorder 1, %s14
      %p189 = scmp.lt.s32.totalorder %s14, 3
      %p190 = pnand %p188, %p189
      %p191 = pneg %p190
      // Predicated region
      $region37: #{attention_forward.1} parent=5 // pred_check
        _
      $region38: #{attention_forward.1} parent=5 // pred_check_branch
        %193 = sbr.rel (%p190) target = $region40
      $region39: #{attention_forward.1} parent=5 // pred_region
        %s194 = ssub.s32 %s14, 1
        %p195 = scmp.lt.s32.totalorder %s19, 1
        %s196 = scalar_select %p195, %s19, 1
        %s197 = smul.addr %s196, 8
        %s198 = scalar_lea.vmem %s0, %s197
        %p199 = pneg %p40
        %p200 = pneg %p37
        %p201 = pneg %p61
        %p202 = pneg %p58
        %p203 = pneg %p82
        %p204 = pneg %p79
        %p205 = pneg %p103
        %p206 = pneg %p100
        %p207 = pneg %p124
        %p208 = pneg %p121
        %p209 = pneg %p150
        %p210 = pneg %p147
        %s211 = sand.u32 %s137, 1
        %s212 = scalar_lea.sflag [#allocation5], %s211
        %s213 = sand.u32 %s137, 1
        %s214 = smul.addr %s213, 8
        %s215 = scalar_lea.vmem [#allocation4], %s214
        %p216 = scmp.lt.s32.totalorder %s19, 1
        %s217 = scalar_select %p216, %s19, 1
        %s218 = smul.addr %s217, 8
        %s219 = scalar_lea.vmem %s0, %s218
        %v220 = vld [vmem:[%s219] sm:$0xff]
        %v221 = vld [vmem:[%s1] sm:$0xff]
        %v222 = vld [vmem:[%s1 + $0x8] sm:$0xff]
        %v223 = vld [vmem:[%s1 + $0x10] sm:$0xff]
        %v224 = vld [vmem:[%s1 + $0x18] sm:$0xff]
        %v225 = vld [vmem:[%s2] sm:$0x1]
        %v227 = vlaneseq
        %v228 = vshrl.u32 %v227, 7
        %v229 = vsub.s32 0, %v228
        %v230 = vrot.slane %v225, %v229
        %vm232 = vcmask 261120
        %v234 = vsel %vm232, %v220, 0
        %236 = vmatprep.subr.mxu0 0.0
        %237 = vmatpush1.msra.mxu0 0.0
        %238 = vmatprep.subr.mxu0 0.0
        %239 = vmatpush1.msra.mxu0 0.0
        %240 = vmatprep.subr.mxu0 0.0
        %241 = vmatpush1.msra.mxu0 0.0
        %242 = vmatprep.subr.mxu0 0.0
        %243 = vmatpush1.msra.mxu0 0.0
        %244 = vmatprep.subr.mxu0 0.0
        %245 = vmatpush1.msra.mxu0 0.0
        %246 = vmatprep.subr.mxu0 0.0
        %247 = vmatpush1.msra.mxu0 0.0
        %248 = vmatprep.subr.mxu0 0.0
        %249 = vmatpush1.msra.mxu0 0.0
        %250 = vmatprep.subr.mxu0 0.0
        %251 = vmatpush1.msra.mxu0 0.0
        %252 = vmatprep.subr.mxu0 0.0
        %253 = vmatpush1.msra.mxu0 0.0
        %254 = vmatprep.subr.mxu0 0.0
        %255 = vmatpush1.msra.mxu0 0.0
        %256 = vmatprep.subr.mxu0 0.0
        %257 = vmatpush1.msra.mxu0 0.0
        %258 = vmatprep.subr.mxu0 0.0
        %259 = vmatpush1.msra.mxu0 0.0
        %260 = vmatprep.subr.mxu0 0.0
        %261 = vmatpush1.msra.mxu0 %v224
        %262 = vmatprep.subr.mxu0 0.0
        %263 = vmatpush1.msra.mxu0 %v223
        %264 = vmatprep.subr.mxu0 0.0
        %265 = vmatpush1.msra.mxu0 %v222
        %266 = vmatprep.subr.mxu0 0.0
        %267 = vmatpush1.msra.mxu0 %v221
        %268 = vmatprep.subr.mxu0 0.0
        %269 = vmatpush2.msra.mxu0 0.0
        %270 = vmatprep.subr.mxu0 0.0
        %271 = vmatpush2.msra.mxu0 0.0
        %272 = vmatprep.subr.mxu0 0.0
        %273 = vmatpush2.msra.mxu0 0.0
        %274 = vmatprep.subr.mxu0 0.0
        %275 = vmatpush2.msra.mxu0 0.0
        %276 = vmatprep.subr.mxu0 0.0
        %277 = vmatpush2.msra.mxu0 0.0
        %278 = vmatprep.subr.mxu0 0.0
        %279 = vmatpush2.msra.mxu0 0.0
        %280 = vmatprep.subr.mxu0 0.0
        %281 = vmatpush2.msra.mxu0 0.0
        %282 = vmatprep.subr.mxu0 0.0
        %283 = vmatpush2.msra.mxu0 0.0
        %284 = vmatprep.subr.mxu0 0.0
        %285 = vmatpush2.msra.mxu0 0.0
        %286 = vmatprep.subr.mxu0 0.0
        %287 = vmatpush2.msra.mxu0 0.0
        %288 = vmatprep.subr.mxu0 0.0
        %289 = vmatpush2.msra.mxu0 0.0
        %290 = vmatprep.subr.mxu0 0.0
        %291 = vmatpush2.msra.mxu0 0.0
        %292 = vmatprep.subr.mxu0 0.0
        %293 = vmatpush2.msra.mxu0 0.0
        %294 = vmatprep.subr.mxu0 0.0
        %295 = vmatpush2.msra.mxu0 0.0
        %296 = vmatprep.subr.mxu0 0.0
        %297 = vmatpush2.msra.mxu0 0.0
        %298 = vmatprep.subr.mxu0 0.0
        %299 = vmatpush2.msra.mxu0 0.0
        %300 = vmatprep.mubr.f32.mxu0 0.0
        %301 = vmatmul.mubr.f32.gmra.mxu0 %v234
        %v302 = vpop.f32.mrf.mxu0
        %v303 = vadd.f32 %v230, %v302
        %v304 = vpop.f32.mrf.mxu0
        %305 = vdwg.mxu0
        %vm306 = vcmask 785408
        %307 = vst.msk [vmem:[#allocation2] sm:$0xff] %vm306, %v303
        %v308 = vld [vmem:[#allocation2] sm:$0xff]
        %310 = vrot.lane.b32.xlu0 %v308, 96
        %v311 = vpop.permute.xlu0 %310
        %vm312 = vcmask 31744
        %v313 = vsel %vm312, %v308, 0
        %v315 = vsel %vm312, %v311, 0
        %317 = vmatprep.subr.mxu0 0.0
        %318 = vmatpush1.xpose.msra.mxu0 0.0
        %319 = vmatprep.subr.mxu0 0.0
        %320 = vmatpush1.xpose.msra.mxu0 0.0
        %321 = vmatprep.subr.mxu0 0.0
        %322 = vmatpush1.xpose.msra.mxu0 0.0
        %323 = vmatprep.subr.mxu0 0.0
        %324 = vmatpush1.xpose.msra.mxu0 0.0
        %325 = vmatprep.subr.mxu0 0.0
        %326 = vmatpush1.xpose.msra.mxu0 0.0
        %327 = vmatprep.subr.mxu0 0.0
        %328 = vmatpush1.xpose.msra.mxu0 0.0
        %329 = vmatprep.subr.mxu0 0.0
        %330 = vmatpush1.xpose.msra.mxu0 0.0
        %331 = vmatprep.subr.mxu0 0.0
        %332 = vmatpush1.xpose.msra.mxu0 0.0
        %333 = vmatprep.subr.mxu0 0.0
        %334 = vmatpush1.xpose.msra.mxu0 0.0
        %335 = vmatprep.subr.mxu0 0.0
        %336 = vmatpush1.xpose.msra.mxu0 0.0
        %337 = vmatprep.subr.mxu0 0.0
        %338 = vmatpush1.xpose.msra.mxu0 0.0
        %339 = vmatprep.subr.mxu0 0.0
        %340 = vmatpush1.xpose.msra.mxu0 0.0
        %341 = vmatprep.subr.mxu0 0.0
        %342 = vmatpush1.xpose.msra.mxu0 0.0
        %343 = vmatprep.subr.mxu0 0.0
        %344 = vmatpush1.xpose.msra.mxu0 0.0
        %345 = vmatprep.subr.mxu0 0.0
        %346 = vmatpush1.xpose.msra.mxu0 0.0
        %347 = vmatprep.subr.mxu0 0.0
        %348 = vmatpush1.xpose.msra.mxu0 %v315
        %349 = vmatprep.subr.mxu0 0.0
        %350 = vmatpush2.xpose.msra.mxu0 0.0
        %351 = vmatprep.subr.mxu0 0.0
        %352 = vmatpush2.xpose.msra.mxu0 0.0
        %353 = vmatprep.subr.mxu0 0.0
        %354 = vmatpush2.xpose.msra.mxu0 0.0
        %355 = vmatprep.subr.mxu0 0.0
        %356 = vmatpush2.xpose.msra.mxu0 0.0
        %357 = vmatprep.subr.mxu0 0.0
        %358 = vmatpush2.xpose.msra.mxu0 0.0
        %359 = vmatprep.subr.mxu0 0.0
        %360 = vmatpush2.xpose.msra.mxu0 0.0
        %361 = vmatprep.subr.mxu0 0.0
        %362 = vmatpush2.xpose.msra.mxu0 0.0
        %363 = vmatprep.subr.mxu0 0.0
        %364 = vmatpush2.xpose.msra.mxu0 0.0
        %365 = vmatprep.subr.mxu0 0.0
        %366 = vmatpush2.xpose.msra.mxu0 0.0
        %367 = vmatprep.subr.mxu0 0.0
        %368 = vmatpush2.xpose.msra.mxu0 0.0
        %369 = vmatprep.subr.mxu0 0.0
        %370 = vmatpush2.xpose.msra.mxu0 0.0
        %371 = vmatprep.subr.mxu0 0.0
        %372 = vmatpush2.xpose.msra.mxu0 0.0
        %373 = vmatprep.subr.mxu0 0.0
        %374 = vmatpush2.xpose.msra.mxu0 0.0
        %375 = vmatprep.subr.mxu0 0.0
        %376 = vmatpush2.xpose.msra.mxu0 0.0
        %377 = vmatprep.subr.mxu0 0.0
        %378 = vmatpush2.xpose.msra.mxu0 0.0
        %379 = vmatprep.subr.mxu0 0.0
        %380 = vmatpush2.xpose.msra.mxu0 0.0
        %381 = vmatprep.mubr.f32.mxu0 0.0
        %382 = vmatmul.mubr.f32.gmra.mxu0 %v313
        %v383 = vpop.f32.mrf.mxu0
        %v384 = vadd.f32 0.0, %v383
        %v385 = vpop.f32.mrf.mxu0
        %386 = vdwg.mxu0
        %vm387 = vcmask 64512
        %v388 = vsel %vm387, %v384, -inf
        %389 = vmax.xlane.f32.xlu0 %v388
        %v390 = vpop.xlane.xlu0 %389
        %v391 = vsub.f32 %v384, %v390
        %v392 = vmul.f32 %v391, 1.442695
        %v393 = vpow.pop %v392
        %v394 = vsel %vm387, %v393, 0.0
        %395 = vadd.xlane.f32.xlu0 %v394
        %v396 = vpop.xlane.xlu0 %395
        %v397 = vrcp.pop %v396
        %v398 = vmul.f32 %v393, %v397
        %399 = vrot.lane.b32.xlu0 %v308, 64
        %v400 = vpop.permute.xlu0 %399
        %v403 = vsel %vm387, %v398, 0
        %405 = vmatprep.subr.mxu0 0.0
        %406 = vmatpush1.msra.mxu0 0.0
        %407 = vmatprep.subr.mxu0 0.0
        %408 = vmatpush1.msra.mxu0 0.0
        %409 = vmatprep.subr.mxu0 0.0
        %410 = vmatpush1.msra.mxu0 0.0
        %411 = vmatprep.subr.mxu0 0.0
        %412 = vmatpush1.msra.mxu0 0.0
        %413 = vmatprep.subr.mxu0 0.0
        %414 = vmatpush1.msra.mxu0 0.0
        %415 = vmatprep.subr.mxu0 0.0
        %416 = vmatpush1.msra.mxu0 0.0
        %417 = vmatprep.subr.mxu0 0.0
        %418 = vmatpush1.msra.mxu0 0.0
        %419 = vmatprep.subr.mxu0 0.0
        %420 = vmatpush1.msra.mxu0 0.0
        %421 = vmatprep.subr.mxu0 0.0
        %422 = vmatpush1.msra.mxu0 0.0
        %423 = vmatprep.subr.mxu0 0.0
        %424 = vmatpush1.msra.mxu0 0.0
        %425 = vmatprep.subr.mxu0 0.0
        %426 = vmatpush1.msra.mxu0 0.0
        %427 = vmatprep.subr.mxu0 0.0
        %428 = vmatpush1.msra.mxu0 0.0
        %429 = vmatprep.subr.mxu0 0.0
        %430 = vmatpush1.msra.mxu0 0.0
        %431 = vmatprep.subr.mxu0 0.0
        %432 = vmatpush1.msra.mxu0 0.0
        %433 = vmatprep.subr.mxu0 0.0
        %434 = vmatpush1.msra.mxu0 0.0
        %435 = vmatprep.subr.mxu0 0.0
        %436 = vmatpush1.msra.mxu0 %v400
        %437 = vmatprep.subr.mxu0 0.0
        %438 = vmatpush2.msra.mxu0 0.0
        %439 = vmatprep.subr.mxu0 0.0
        %440 = vmatpush2.msra.mxu0 0.0
        %441 = vmatprep.subr.mxu0 0.0
        %442 = vmatpush2.msra.mxu0 0.0
        %443 = vmatprep.subr.mxu0 0.0
        %444 = vmatpush2.msra.mxu0 0.0
        %445 = vmatprep.subr.mxu0 0.0
        %446 = vmatpush2.msra.mxu0 0.0
        %447 = vmatprep.subr.mxu0 0.0
        %448 = vmatpush2.msra.mxu0 0.0
        %449 = vmatprep.subr.mxu0 0.0
        %450 = vmatpush2.msra.mxu0 0.0
        %451 = vmatprep.subr.mxu0 0.0
        %452 = vmatpush2.msra.mxu0 0.0
        %453 = vmatprep.subr.mxu0 0.0
        %454 = vmatpush2.msra.mxu0 0.0
        %455 = vmatprep.subr.mxu0 0.0
        %456 = vmatpush2.msra.mxu0 0.0
        %457 = vmatprep.subr.mxu0 0.0
        %458 = vmatpush2.msra.mxu0 0.0
        %459 = vmatprep.subr.mxu0 0.0
        %460 = vmatpush2.msra.mxu0 0.0
        %461 = vmatprep.subr.mxu0 0.0
        %462 = vmatpush2.msra.mxu0 0.0
        %463 = vmatprep.subr.mxu0 0.0
        %464 = vmatpush2.msra.mxu0 0.0
        %465 = vmatprep.subr.mxu0 0.0
        %466 = vmatpush2.msra.mxu0 0.0
        %467 = vmatprep.subr.mxu0 0.0
        %468 = vmatpush2.msra.mxu0 0.0
        %469 = vmatprep.mubr.f32.mxu0 0.0
        %470 = vmatmul.mubr.f32.gmra.mxu0 %v403
        %v471 = vpop.f32.mrf.mxu0
        %v472 = vadd.f32 0.0, %v471
        %v473 = vpop.f32.mrf.mxu0
        %474 = vdwg.mxu0
        %475 = vst.msk [vmem:[#allocation3] sm:$0xff] %vm312, %v472
        %v476 = vld [vmem:[#allocation2] sm:$0xff]
        %478 = vrot.lane.b32.xlu0 %v476, 124
        %v479 = vpop.permute.xlu0 %478
        %480 = vrot.lane.b32.xlu0 %v476, 92
        %v481 = vpop.permute.xlu0 %480
        %v482 = vsel %vm312, %v479, 0
        %v484 = vsel %vm312, %v481, 0
        %486 = vmatprep.subr.mxu0 0.0
        %487 = vmatpush1.xpose.msra.mxu0 0.0
        %488 = vmatprep.subr.mxu0 0.0
        %489 = vmatpush1.xpose.msra.mxu0 0.0
        %490 = vmatprep.subr.mxu0 0.0
        %491 = vmatpush1.xpose.msra.mxu0 0.0
        %492 = vmatprep.subr.mxu0 0.0
        %493 = vmatpush1.xpose.msra.mxu0 0.0
        %494 = vmatprep.subr.mxu0 0.0
        %495 = vmatpush1.xpose.msra.mxu0 0.0
        %496 = vmatprep.subr.mxu0 0.0
        %497 = vmatpush1.xpose.msra.mxu0 0.0
        %498 = vmatprep.subr.mxu0 0.0
        %499 = vmatpush1.xpose.msra.mxu0 0.0
        %500 = vmatprep.subr.mxu0 0.0
        %501 = vmatpush1.xpose.msra.mxu0 0.0
        %502 = vmatprep.subr.mxu0 0.0
        %503 = vmatpush1.xpose.msra.mxu0 0.0
        %504 = vmatprep.subr.mxu0 0.0
        %505 = vmatpush1.xpose.msra.mxu0 0.0
        %506 = vmatprep.subr.mxu0 0.0
        %507 = vmatpush1.xpose.msra.mxu0 0.0
        %508 = vmatprep.subr.mxu0 0.0
        %509 = vmatpush1.xpose.msra.mxu0 0.0
        %510 = vmatprep.subr.mxu0 0.0
        %511 = vmatpush1.xpose.msra.mxu0 0.0
        %512 = vmatprep.subr.mxu0 0.0
        %513 = vmatpush1.xpose.msra.mxu0 0.0
        %514 = vmatprep.subr.mxu0 0.0
        %515 = vmatpush1.xpose.msra.mxu0 0.0
        %516 = vmatprep.subr.mxu0 0.0
        %517 = vmatpush1.xpose.msra.mxu0 %v484
        %518 = vmatprep.subr.mxu0 0.0
        %519 = vmatpush2.xpose.msra.mxu0 0.0
        %520 = vmatprep.subr.mxu0 0.0
        %521 = vmatpush2.xpose.msra.mxu0 0.0
        %522 = vmatprep.subr.mxu0 0.0
        %523 = vmatpush2.xpose.msra.mxu0 0.0
        %524 = vmatprep.subr.mxu0 0.0
        %525 = vmatpush2.xpose.msra.mxu0 0.0
        %526 = vmatprep.subr.mxu0 0.0
        %527 = vmatpush2.xpose.msra.mxu0 0.0
        %528 = vmatprep.subr.mxu0 0.0
        %529 = vmatpush2.xpose.msra.mxu0 0.0
        %530 = vmatprep.subr.mxu0 0.0
        %531 = vmatpush2.xpose.msra.mxu0 0.0
        %532 = vmatprep.subr.mxu0 0.0
        %533 = vmatpush2.xpose.msra.mxu0 0.0
        %534 = vmatprep.subr.mxu0 0.0
        %535 = vmatpush2.xpose.msra.mxu0 0.0
        %536 = vmatprep.subr.mxu0 0.0
        %537 = vmatpush2.xpose.msra.mxu0 0.0
        %538 = vmatprep.subr.mxu0 0.0
        %539 = vmatpush2.xpose.msra.mxu0 0.0
        %540 = vmatprep.subr.mxu0 0.0
        %541 = vmatpush2.xpose.msra.mxu0 0.0
        %542 = vmatprep.subr.mxu0 0.0
        %543 = vmatpush2.xpose.msra.mxu0 0.0
        %544 = vmatprep.subr.mxu0 0.0
        %545 = vmatpush2.xpose.msra.mxu0 0.0
        %546 = vmatprep.subr.mxu0 0.0
        %547 = vmatpush2.xpose.msra.mxu0 0.0
        %548 = vmatprep.subr.mxu0 0.0
        %549 = vmatpush2.xpose.msra.mxu0 0.0
        %550 = vmatprep.mubr.f32.mxu0 0.0
        %551 = vmatmul.mubr.f32.gmra.mxu0 %v482
        %v552 = vpop.f32.mrf.mxu0
        %v553 = vadd.f32 0.0, %v552
        %v554 = vpop.f32.mrf.mxu0
        %555 = vdwg.mxu0
        %v556 = vsel %vm387, %v553, -inf
        %557 = vmax.xlane.f32.xlu0 %v556
        %v558 = vpop.xlane.xlu0 %557
        %v559 = vsub.f32 %v553, %v558
        %v560 = vmul.f32 %v559, 1.442695
        %v561 = vpow.pop %v560
        %v562 = vsel %vm387, %v561, 0.0
        %563 = vadd.xlane.f32.xlu0 %v562
        %v564 = vpop.xlane.xlu0 %563
        %v565 = vrcp.pop %v564
        %v566 = vmul.f32 %v561, %v565
        %567 = vrot.lane.b32.xlu0 %v476, 60
        %v568 = vpop.permute.xlu0 %567
        %v571 = vsel %vm387, %v566, 0
        %573 = vmatprep.subr.mxu0 0.0
        %574 = vmatpush1.msra.mxu0 0.0
        %575 = vmatprep.subr.mxu0 0.0
        %576 = vmatpush1.msra.mxu0 0.0
        %577 = vmatprep.subr.mxu0 0.0
        %578 = vmatpush1.msra.mxu0 0.0
        %579 = vmatprep.subr.mxu0 0.0
        %580 = vmatpush1.msra.mxu0 0.0
        %581 = vmatprep.subr.mxu0 0.0
        %582 = vmatpush1.msra.mxu0 0.0
        %583 = vmatprep.subr.mxu0 0.0
        %584 = vmatpush1.msra.mxu0 0.0
        %585 = vmatprep.subr.mxu0 0.0
        %586 = vmatpush1.msra.mxu0 0.0
        %587 = vmatprep.subr.mxu0 0.0
        %588 = vmatpush1.msra.mxu0 0.0
        %589 = vmatprep.subr.mxu0 0.0
        %590 = vmatpush1.msra.mxu0 0.0
        %591 = vmatprep.subr.mxu0 0.0
        %592 = vmatpush1.msra.mxu0 0.0
        %593 = vmatprep.subr.mxu0 0.0
        %594 = vmatpush1.msra.mxu0 0.0
        %595 = vmatprep.subr.mxu0 0.0
        %596 = vmatpush1.msra.mxu0 0.0
        %597 = vmatprep.subr.mxu0 0.0
        %598 = vmatpush1.msra.mxu0 0.0
        %599 = vmatprep.subr.mxu0 0.0
        %600 = vmatpush1.msra.mxu0 0.0
        %601 = vmatprep.subr.mxu0 0.0
        %602 = vmatpush1.msra.mxu0 0.0
        %603 = vmatprep.subr.mxu0 0.0
        %604 = vmatpush1.msra.mxu0 %v568
        %605 = vmatprep.subr.mxu0 0.0
        %606 = vmatpush2.msra.mxu0 0.0
        %607 = vmatprep.subr.mxu0 0.0
        %608 = vmatpush2.msra.mxu0 0.0
        %609 = vmatprep.subr.mxu0 0.0
        %610 = vmatpush2.msra.mxu0 0.0
        %611 = vmatprep.subr.mxu0 0.0
        %612 = vmatpush2.msra.mxu0 0.0
        %613 = vmatprep.subr.mxu0 0.0
        %614 = vmatpush2.msra.mxu0 0.0
        %615 = vmatprep.subr.mxu0 0.0
        %616 = vmatpush2.msra.mxu0 0.0
        %617 = vmatprep.subr.mxu0 0.0
        %618 = vmatpush2.msra.mxu0 0.0
        %619 = vmatprep.subr.mxu0 0.0
        %620 = vmatpush2.msra.mxu0 0.0
        %621 = vmatprep.subr.mxu0 0.0
        %622 = vmatpush2.msra.mxu0 0.0
        %623 = vmatprep.subr.mxu0 0.0
        %624 = vmatpush2.msra.mxu0 0.0
        %625 = vmatprep.subr.mxu0 0.0
        %626 = vmatpush2.msra.mxu0 0.0
        %627 = vmatprep.subr.mxu0 0.0
        %628 = vmatpush2.msra.mxu0 0.0
        %629 = vmatprep.subr.mxu0 0.0
        %630 = vmatpush2.msra.mxu0 0.0
        %631 = vmatprep.subr.mxu0 0.0
        %632 = vmatpush2.msra.mxu0 0.0
        %633 = vmatprep.subr.mxu0 0.0
        %634 = vmatpush2.msra.mxu0 0.0
        %635 = vmatprep.subr.mxu0 0.0
        %636 = vmatpush2.msra.mxu0 0.0
        %637 = vmatprep.mubr.f32.mxu0 0.0
        %638 = vmatmul.mubr.f32.gmra.mxu0 %v571
        %v639 = vpop.f32.mrf.mxu0
        %v640 = vadd.f32 0.0, %v639
        %v641 = vpop.f32.mrf.mxu0
        %642 = vdwg.mxu0
        %644 = vrot.lane.b32.xlu0 %v640, 4
        %v645 = vpop.permute.xlu0 %644
        %vm647 = vcmask 64544
        %648 = vst.msk [vmem:[#allocation3] sm:$0xff] %vm647, %v645
        %v649 = vld [vmem:[#allocation2] sm:$0xff]
        %651 = vrot.lane.b32.xlu0 %v649, 120
        %v652 = vpop.permute.xlu0 %651
        %653 = vrot.lane.b32.xlu0 %v649, 88
        %v654 = vpop.permute.xlu0 %653
        %v655 = vsel %vm312, %v652, 0
        %v657 = vsel %vm312, %v654, 0
        %659 = vmatprep.subr.mxu0 0.0
        %660 = vmatpush1.xpose.msra.mxu0 0.0
        %661 = vmatprep.subr.mxu0 0.0
        %662 = vmatpush1.xpose.msra.mxu0 0.0
        %663 = vmatprep.subr.mxu0 0.0
        %664 = vmatpush1.xpose.msra.mxu0 0.0
        %665 = vmatprep.subr.mxu0 0.0
        %666 = vmatpush1.xpose.msra.mxu0 0.0
        %667 = vmatprep.subr.mxu0 0.0
        %668 = vmatpush1.xpose.msra.mxu0 0.0
        %669 = vmatprep.subr.mxu0 0.0
        %670 = vmatpush1.xpose.msra.mxu0 0.0
        %671 = vmatprep.subr.mxu0 0.0
        %672 = vmatpush1.xpose.msra.mxu0 0.0
        %673 = vmatprep.subr.mxu0 0.0
        %674 = vmatpush1.xpose.msra.mxu0 0.0
        %675 = vmatprep.subr.mxu0 0.0
        %676 = vmatpush1.xpose.msra.mxu0 0.0
        %677 = vmatprep.subr.mxu0 0.0
        %678 = vmatpush1.xpose.msra.mxu0 0.0
        %679 = vmatprep.subr.mxu0 0.0
        %680 = vmatpush1.xpose.msra.mxu0 0.0
        %681 = vmatprep.subr.mxu0 0.0
        %682 = vmatpush1.xpose.msra.mxu0 0.0
        %683 = vmatprep.subr.mxu0 0.0
        %684 = vmatpush1.xpose.msra.mxu0 0.0
        %685 = vmatprep.subr.mxu0 0.0
        %686 = vmatpush1.xpose.msra.mxu0 0.0
        %687 = vmatprep.subr.mxu0 0.0
        %688 = vmatpush1.xpose.msra.mxu0 0.0
        %689 = vmatprep.subr.mxu0 0.0
        %690 = vmatpush1.xpose.msra.mxu0 %v657
        %691 = vmatprep.subr.mxu0 0.0
        %692 = vmatpush2.xpose.msra.mxu0 0.0
        %693 = vmatprep.subr.mxu0 0.0
        %694 = vmatpush2.xpose.msra.mxu0 0.0
        %695 = vmatprep.subr.mxu0 0.0
        %696 = vmatpush2.xpose.msra.mxu0 0.0
        %697 = vmatprep.subr.mxu0 0.0
        %698 = vmatpush2.xpose.msra.mxu0 0.0
        %699 = vmatprep.subr.mxu0 0.0
        %700 = vmatpush2.xpose.msra.mxu0 0.0
        %701 = vmatprep.subr.mxu0 0.0
        %702 = vmatpush2.xpose.msra.mxu0 0.0
        %703 = vmatprep.subr.mxu0 0.0
        %704 = vmatpush2.xpose.msra.mxu0 0.0
        %705 = vmatprep.subr.mxu0 0.0
        %706 = vmatpush2.xpose.msra.mxu0 0.0
        %707 = vmatprep.subr.mxu0 0.0
        %708 = vmatpush2.xpose.msra.mxu0 0.0
        %709 = vmatprep.subr.mxu0 0.0
        %710 = vmatpush2.xpose.msra.mxu0 0.0
        %711 = vmatprep.subr.mxu0 0.0
        %712 = vmatpush2.xpose.msra.mxu0 0.0
        %713 = vmatprep.subr.mxu0 0.0
        %714 = vmatpush2.xpose.msra.mxu0 0.0
        %715 = vmatprep.subr.mxu0 0.0
        %716 = vmatpush2.xpose.msra.mxu0 0.0
        %717 = vmatprep.subr.mxu0 0.0
        %718 = vmatpush2.xpose.msra.mxu0 0.0
        %719 = vmatprep.subr.mxu0 0.0
        %720 = vmatpush2.xpose.msra.mxu0 0.0
        %721 = vmatprep.subr.mxu0 0.0
        %722 = vmatpush2.xpose.msra.mxu0 0.0
        %723 = vmatprep.mubr.f32.mxu0 0.0
        %724 = vmatmul.mubr.f32.gmra.mxu0 %v655
        %v725 = vpop.f32.mrf.mxu0
        %v726 = vadd.f32 0.0, %v725
        %v727 = vpop.f32.mrf.mxu0
        %728 = vdwg.mxu0
        %v729 = vsel %vm387, %v726, -inf
        %730 = vmax.xlane.f32.xlu0 %v729
        %v731 = vpop.xlane.xlu0 %730
        %v732 = vsub.f32 %v726, %v731
        %v733 = vmul.f32 %v732, 1.442695
        %v734 = vpow.pop %v733
        %v735 = vsel %vm387, %v734, 0.0
        %736 = vadd.xlane.f32.xlu0 %v735
        %v737 = vpop.xlane.xlu0 %736
        %v738 = vrcp.pop %v737
        %v739 = vmul.f32 %v734, %v738
        %740 = vrot.lane.b32.xlu0 %v649, 56
        %v741 = vpop.permute.xlu0 %740
        %v744 = vsel %vm387, %v739, 0
        %746 = vmatprep.subr.mxu0 0.0
        %747 = vmatpush1.msra.mxu0 0.0
        %748 = vmatprep.subr.mxu0 0.0
        %749 = vmatpush1.msra.mxu0 0.0
        %750 = vmatprep.subr.mxu0 0.0
        %751 = vmatpush1.msra.mxu0 0.0
        %752 = vmatprep.subr.mxu0 0.0
        %753 = vmatpush1.msra.mxu0 0.0
        %754 = vmatprep.subr.mxu0 0.0
        %755 = vmatpush1.msra.mxu0 0.0
        %756 = vmatprep.subr.mxu0 0.0
        %757 = vmatpush1.msra.mxu0 0.0
        %758 = vmatprep.subr.mxu0 0.0
        %759 = vmatpush1.msra.mxu0 0.0
        %760 = vmatprep.subr.mxu0 0.0
        %761 = vmatpush1.msra.mxu0 0.0
        %762 = vmatprep.subr.mxu0 0.0
        %763 = vmatpush1.msra.mxu0 0.0
        %764 = vmatprep.subr.mxu0 0.0
        %765 = vmatpush1.msra.mxu0 0.0
        %766 = vmatprep.subr.mxu0 0.0
        %767 = vmatpush1.msra.mxu0 0.0
        %768 = vmatprep.subr.mxu0 0.0
        %769 = vmatpush1.msra.mxu0 0.0
        %770 = vmatprep.subr.mxu0 0.0
        %771 = vmatpush1.msra.mxu0 0.0
        %772 = vmatprep.subr.mxu0 0.0
        %773 = vmatpush1.msra.mxu0 0.0
        %774 = vmatprep.subr.mxu0 0.0
        %775 = vmatpush1.msra.mxu0 0.0
        %776 = vmatprep.subr.mxu0 0.0
        %777 = vmatpush1.msra.mxu0 %v741
        %778 = vmatprep.subr.mxu0 0.0
        %779 = vmatpush2.msra.mxu0 0.0
        %780 = vmatprep.subr.mxu0 0.0
        %781 = vmatpush2.msra.mxu0 0.0
        %782 = vmatprep.subr.mxu0 0.0
        %783 = vmatpush2.msra.mxu0 0.0
        %784 = vmatprep.subr.mxu0 0.0
        %785 = vmatpush2.msra.mxu0 0.0
        %786 = vmatprep.subr.mxu0 0.0
        %787 = vmatpush2.msra.mxu0 0.0
        %788 = vmatprep.subr.mxu0 0.0
        %789 = vmatpush2.msra.mxu0 0.0
        %790 = vmatprep.subr.mxu0 0.0
        %791 = vmatpush2.msra.mxu0 0.0
        %792 = vmatprep.subr.mxu0 0.0
        %793 = vmatpush2.msra.mxu0 0.0
        %794 = vmatprep.subr.mxu0 0.0
        %795 = vmatpush2.msra.mxu0 0.0
        %796 = vmatprep.subr.mxu0 0.0
        %797 = vmatpush2.msra.mxu0 0.0
        %798 = vmatprep.subr.mxu0 0.0
        %799 = vmatpush2.msra.mxu0 0.0
        %800 = vmatprep.subr.mxu0 0.0
        %801 = vmatpush2.msra.mxu0 0.0
        %802 = vmatprep.subr.mxu0 0.0
        %803 = vmatpush2.msra.mxu0 0.0
        %804 = vmatprep.subr.mxu0 0.0
        %805 = vmatpush2.msra.mxu0 0.0
        %806 = vmatprep.subr.mxu0 0.0
        %807 = vmatpush2.msra.mxu0 0.0
        %808 = vmatprep.subr.mxu0 0.0
        %809 = vmatpush2.msra.mxu0 0.0
        %810 = vmatprep.mubr.f32.mxu0 0.0
        %811 = vmatmul.mubr.f32.gmra.mxu0 %v744
        %v812 = vpop.f32.mrf.mxu0
        %v813 = vadd.f32 0.0, %v812
        %v814 = vpop.f32.mrf.mxu0
        %815 = vdwg.mxu0
        %817 = vrot.lane.b32.xlu0 %v813, 8
        %v818 = vpop.permute.xlu0 %817
        %vm820 = vcmask 97344
        %821 = vst.msk [vmem:[#allocation3] sm:$0xff] %vm820, %v818
        %v822 = vld [vmem:[#allocation2] sm:$0xff]
        %824 = vrot.lane.b32.xlu0 %v822, 116
        %v825 = vpop.permute.xlu0 %824
        %826 = vrot.lane.b32.xlu0 %v822, 84
        %v827 = vpop.permute.xlu0 %826
        %v828 = vsel %vm312, %v825, 0
        %v830 = vsel %vm312, %v827, 0
        %832 = vmatprep.subr.mxu0 0.0
        %833 = vmatpush1.xpose.msra.mxu0 0.0
        %834 = vmatprep.subr.mxu0 0.0
        %835 = vmatpush1.xpose.msra.mxu0 0.0
        %836 = vmatprep.subr.mxu0 0.0
        %837 = vmatpush1.xpose.msra.mxu0 0.0
        %838 = vmatprep.subr.mxu0 0.0
        %839 = vmatpush1.xpose.msra.mxu0 0.0
        %840 = vmatprep.subr.mxu0 0.0
        %841 = vmatpush1.xpose.msra.mxu0 0.0
        %842 = vmatprep.subr.mxu0 0.0
        %843 = vmatpush1.xpose.msra.mxu0 0.0
        %844 = vmatprep.subr.mxu0 0.0
        %845 = vmatpush1.xpose.msra.mxu0 0.0
        %846 = vmatprep.subr.mxu0 0.0
        %847 = vmatpush1.xpose.msra.mxu0 0.0
        %848 = vmatprep.subr.mxu0 0.0
        %849 = vmatpush1.xpose.msra.mxu0 0.0
        %850 = vmatprep.subr.mxu0 0.0
        %851 = vmatpush1.xpose.msra.mxu0 0.0
        %852 = vmatprep.subr.mxu0 0.0
        %853 = vmatpush1.xpose.msra.mxu0 0.0
        %854 = vmatprep.subr.mxu0 0.0
        %855 = vmatpush1.xpose.msra.mxu0 0.0
        %856 = vmatprep.subr.mxu0 0.0
        %857 = vmatpush1.xpose.msra.mxu0 0.0
        %858 = vmatprep.subr.mxu0 0.0
        %859 = vmatpush1.xpose.msra.mxu0 0.0
        %860 = vmatprep.subr.mxu0 0.0
        %861 = vmatpush1.xpose.msra.mxu0 0.0
        %862 = vmatprep.subr.mxu0 0.0
        %863 = vmatpush1.xpose.msra.mxu0 %v830
        %864 = vmatprep.subr.mxu0 0.0
        %865 = vmatpush2.xpose.msra.mxu0 0.0
        %866 = vmatprep.subr.mxu0 0.0
        %867 = vmatpush2.xpose.msra.mxu0 0.0
        %868 = vmatprep.subr.mxu0 0.0
        %869 = vmatpush2.xpose.msra.mxu0 0.0
        %870 = vmatprep.subr.mxu0 0.0
        %871 = vmatpush2.xpose.msra.mxu0 0.0
        %872 = vmatprep.subr.mxu0 0.0
        %873 = vmatpush2.xpose.msra.mxu0 0.0
        %874 = vmatprep.subr.mxu0 0.0
        %875 = vmatpush2.xpose.msra.mxu0 0.0
        %876 = vmatprep.subr.mxu0 0.0
        %877 = vmatpush2.xpose.msra.mxu0 0.0
        %878 = vmatprep.subr.mxu0 0.0
        %879 = vmatpush2.xpose.msra.mxu0 0.0
        %880 = vmatprep.subr.mxu0 0.0
        %881 = vmatpush2.xpose.msra.mxu0 0.0
        %882 = vmatprep.subr.mxu0 0.0
        %883 = vmatpush2.xpose.msra.mxu0 0.0
        %884 = vmatprep.subr.mxu0 0.0
        %885 = vmatpush2.xpose.msra.mxu0 0.0
        %886 = vmatprep.subr.mxu0 0.0
        %887 = vmatpush2.xpose.msra.mxu0 0.0
        %888 = vmatprep.subr.mxu0 0.0
        %889 = vmatpush2.xpose.msra.mxu0 0.0
        %890 = vmatprep.subr.mxu0 0.0
        %891 = vmatpush2.xpose.msra.mxu0 0.0
        %892 = vmatprep.subr.mxu0 0.0
        %893 = vmatpush2.xpose.msra.mxu0 0.0
        %894 = vmatprep.subr.mxu0 0.0
        %895 = vmatpush2.xpose.msra.mxu0 0.0
        %896 = vmatprep.mubr.f32.mxu0 0.0
        %897 = vmatmul.mubr.f32.gmra.mxu0 %v828
        %v898 = vpop.f32.mrf.mxu0
        %v899 = vadd.f32 0.0, %v898
        %v900 = vpop.f32.mrf.mxu0
        %901 = vdwg.mxu0
        %v902 = vsel %vm387, %v899, -inf
        %903 = vmax.xlane.f32.xlu0 %v902
        %v904 = vpop.xlane.xlu0 %903
        %v905 = vsub.f32 %v899, %v904
        %v906 = vmul.f32 %v905, 1.442695
        %v907 = vpow.pop %v906
        %v908 = vsel %vm387, %v907, 0.0
        %909 = vadd.xlane.f32.xlu0 %v908
        %v910 = vpop.xlane.xlu0 %909
        %v911 = vrcp.pop %v910
        %v912 = vmul.f32 %v907, %v911
        %913 = vrot.lane.b32.xlu0 %v822, 52
        %v914 = vpop.permute.xlu0 %913
        %v917 = vsel %vm387, %v912, 0
        %919 = vmatprep.subr.mxu0 0.0
        %920 = vmatpush1.msra.mxu0 0.0
        %921 = vmatprep.subr.mxu0 0.0
        %922 = vmatpush1.msra.mxu0 0.0
        %923 = vmatprep.subr.mxu0 0.0
        %924 = vmatpush1.msra.mxu0 0.0
        %925 = vmatprep.subr.mxu0 0.0
        %926 = vmatpush1.msra.mxu0 0.0
        %927 = vmatprep.subr.mxu0 0.0
        %928 = vmatpush1.msra.mxu0 0.0
        %929 = vmatprep.subr.mxu0 0.0
        %930 = vmatpush1.msra.mxu0 0.0
        %931 = vmatprep.subr.mxu0 0.0
        %932 = vmatpush1.msra.mxu0 0.0
        %933 = vmatprep.subr.mxu0 0.0
        %934 = vmatpush1.msra.mxu0 0.0
        %935 = vmatprep.subr.mxu0 0.0
        %936 = vmatpush1.msra.mxu0 0.0
        %937 = vmatprep.subr.mxu0 0.0
        %938 = vmatpush1.msra.mxu0 0.0
        %939 = vmatprep.subr.mxu0 0.0
        %940 = vmatpush1.msra.mxu0 0.0
        %941 = vmatprep.subr.mxu0 0.0
        %942 = vmatpush1.msra.mxu0 0.0
        %943 = vmatprep.subr.mxu0 0.0
        %944 = vmatpush1.msra.mxu0 0.0
        %945 = vmatprep.subr.mxu0 0.0
        %946 = vmatpush1.msra.mxu0 0.0
        %947 = vmatprep.subr.mxu0 0.0
        %948 = vmatpush1.msra.mxu0 0.0
        %949 = vmatprep.subr.mxu0 0.0
        %950 = vmatpush1.msra.mxu0 %v914
        %951 = vmatprep.subr.mxu0 0.0
        %952 = vmatpush2.msra.mxu0 0.0
        %953 = vmatprep.subr.mxu0 0.0
        %954 = vmatpush2.msra.mxu0 0.0
        %955 = vmatprep.subr.mxu0 0.0
        %956 = vmatpush2.msra.mxu0 0.0
        %957 = vmatprep.subr.mxu0 0.0
        %958 = vmatpush2.msra.mxu0 0.0
        %959 = vmatprep.subr.mxu0 0.0
        %960 = vmatpush2.msra.mxu0 0.0
        %961 = vmatprep.subr.mxu0 0.0
        %962 = vmatpush2.msra.mxu0 0.0
        %963 = vmatprep.subr.mxu0 0.0
        %964 = vmatpush2.msra.mxu0 0.0
        %965 = vmatprep.subr.mxu0 0.0
        %966 = vmatpush2.msra.mxu0 0.0
        %967 = vmatprep.subr.mxu0 0.0
        %968 = vmatpush2.msra.mxu0 0.0
        %969 = vmatprep.subr.mxu0 0.0
        %970 = vmatpush2.msra.mxu0 0.0
        %971 = vmatprep.subr.mxu0 0.0
        %972 = vmatpush2.msra.mxu0 0.0
        %973 = vmatprep.subr.mxu0 0.0
        %974 = vmatpush2.msra.mxu0 0.0
        %975 = vmatprep.subr.mxu0 0.0
        %976 = vmatpush2.msra.mxu0 0.0
        %977 = vmatprep.subr.mxu0 0.0
        %978 = vmatpush2.msra.mxu0 0.0
        %979 = vmatprep.subr.mxu0 0.0
        %980 = vmatpush2.msra.mxu0 0.0
        %981 = vmatprep.subr.mxu0 0.0
        %982 = vmatpush2.msra.mxu0 0.0
        %983 = vmatprep.mubr.f32.mxu0 0.0
        %984 = vmatmul.mubr.f32.gmra.mxu0 %v917
        %v985 = vpop.f32.mrf.mxu0
        %v986 = vadd.f32 0.0, %v985
        %v987 = vpop.f32.mrf.mxu0
        %988 = vdwg.mxu0
        %990 = vrot.lane.b32.xlu0 %v986, 12
        %v991 = vpop.permute.xlu0 %990
        %vm993 = vcmask 130144
        %994 = vst.msk [vmem:[#allocation3] sm:$0xff] %vm993, %v991
        %v995 = vld [vmem:[#allocation2] sm:$0xff]
        %997 = vrot.lane.b32.xlu0 %v995, 112
        %v998 = vpop.permute.xlu0 %997
        %999 = vrot.lane.b32.xlu0 %v995, 80
        %v1000 = vpop.permute.xlu0 %999
        %v1001 = vsel %vm312, %v998, 0
        %v1003 = vsel %vm312, %v1000, 0
        %1005 = vmatprep.subr.mxu0 0.0
        %1006 = vmatpush1.xpose.msra.mxu0 0.0
        %1007 = vmatprep.subr.mxu0 0.0
        %1008 = vmatpush1.xpose.msra.mxu0 0.0
        %1009 = vmatprep.subr.mxu0 0.0
        %1010 = vmatpush1.xpose.msra.mxu0 0.0
        %1011 = vmatprep.subr.mxu0 0.0
        %1012 = vmatpush1.xpose.msra.mxu0 0.0
        %1013 = vmatprep.subr.mxu0 0.0
        %1014 = vmatpush1.xpose.msra.mxu0 0.0
        %1015 = vmatprep.subr.mxu0 0.0
        %1016 = vmatpush1.xpose.msra.mxu0 0.0
        %1017 = vmatprep.subr.mxu0 0.0
        %1018 = vmatpush1.xpose.msra.mxu0 0.0
        %1019 = vmatprep.subr.mxu0 0.0
        %1020 = vmatpush1.xpose.msra.mxu0 0.0
        %1021 = vmatprep.subr.mxu0 0.0
        %1022 = vmatpush1.xpose.msra.mxu0 0.0
        %1023 = vmatprep.subr.mxu0 0.0
        %1024 = vmatpush1.xpose.msra.mxu0 0.0
        %1025 = vmatprep.subr.mxu0 0.0
        %1026 = vmatpush1.xpose.msra.mxu0 0.0
        %1027 = vmatprep.subr.mxu0 0.0
        %1028 = vmatpush1.xpose.msra.mxu0 0.0
        %1029 = vmatprep.subr.mxu0 0.0
        %1030 = vmatpush1.xpose.msra.mxu0 0.0
        %1031 = vmatprep.subr.mxu0 0.0
        %1032 = vmatpush1.xpose.msra.mxu0 0.0
        %1033 = vmatprep.subr.mxu0 0.0
        %1034 = vmatpush1.xpose.msra.mxu0 0.0
        %1035 = vmatprep.subr.mxu0 0.0
        %1036 = vmatpush1.xpose.msra.mxu0 %v1003
        %1037 = vmatprep.subr.mxu0 0.0
        %1038 = vmatpush2.xpose.msra.mxu0 0.0
        %1039 = vmatprep.subr.mxu0 0.0
        %1040 = vmatpush2.xpose.msra.mxu0 0.0
        %1041 = vmatprep.subr.mxu0 0.0
        %1042 = vmatpush2.xpose.msra.mxu0 0.0
        %1043 = vmatprep.subr.mxu0 0.0
        %1044 = vmatpush2.xpose.msra.mxu0 0.0
        %1045 = vmatprep.subr.mxu0 0.0
        %1046 = vmatpush2.xpose.msra.mxu0 0.0
        %1047 = vmatprep.subr.mxu0 0.0
        %1048 = vmatpush2.xpose.msra.mxu0 0.0
        %1049 = vmatprep.subr.mxu0 0.0
        %1050 = vmatpush2.xpose.msra.mxu0 0.0
        %1051 = vmatprep.subr.mxu0 0.0
        %1052 = vmatpush2.xpose.msra.mxu0 0.0
        %1053 = vmatprep.subr.mxu0 0.0
        %1054 = vmatpush2.xpose.msra.mxu0 0.0
        %1055 = vmatprep.subr.mxu0 0.0
        %1056 = vmatpush2.xpose.msra.mxu0 0.0
        %1057 = vmatprep.subr.mxu0 0.0
        %1058 = vmatpush2.xpose.msra.mxu0 0.0
        %1059 = vmatprep.subr.mxu0 0.0
        %1060 = vmatpush2.xpose.msra.mxu0 0.0
        %1061 = vmatprep.subr.mxu0 0.0
        %1062 = vmatpush2.xpose.msra.mxu0 0.0
        %1063 = vmatprep.subr.mxu0 0.0
        %1064 = vmatpush2.xpose.msra.mxu0 0.0
        %1065 = vmatprep.subr.mxu0 0.0
        %1066 = vmatpush2.xpose.msra.mxu0 0.0
        %1067 = vmatprep.subr.mxu0 0.0
        %1068 = vmatpush2.xpose.msra.mxu0 0.0
        %1069 = vmatprep.mubr.f32.mxu0 0.0
        %1070 = vmatmul.mubr.f32.gmra.mxu0 %v1001
        %v1071 = vpop.f32.mrf.mxu0
        %v1072 = vadd.f32 0.0, %v1071
        %v1073 = vpop.f32.mrf.mxu0
        %1074 = vdwg.mxu0
        %v1075 = vsel %vm387, %v1072, -inf
        %1076 = vmax.xlane.f32.xlu0 %v1075
        %v1077 = vpop.xlane.xlu0 %1076
        %v1078 = vsub.f32 %v1072, %v1077
        %v1079 = vmul.f32 %v1078, 1.442695
        %v1080 = vpow.pop %v1079
        %v1081 = vsel %vm387, %v1080, 0.0
        %1082 = vadd.xlane.f32.xlu0 %v1081
        %v1083 = vpop.xlane.xlu0 %1082
        %v1084 = vrcp.pop %v1083
        %v1085 = vmul.f32 %v1080, %v1084
        %1086 = vrot.lane.b32.xlu0 %v995, 48
        %v1087 = vpop.permute.xlu0 %1086
        %v1090 = vsel %vm387, %v1085, 0
        %1092 = vmatprep.subr.mxu0 0.0
        %1093 = vmatpush1.msra.mxu0 0.0
        %1094 = vmatprep.subr.mxu0 0.0
        %1095 = vmatpush1.msra.mxu0 0.0
        %1096 = vmatprep.subr.mxu0 0.0
        %1097 = vmatpush1.msra.mxu0 0.0
        %1098 = vmatprep.subr.mxu0 0.0
        %1099 = vmatpush1.msra.mxu0 0.0
        %1100 = vmatprep.subr.mxu0 0.0
        %1101 = vmatpush1.msra.mxu0 0.0
        %1102 = vmatprep.subr.mxu0 0.0
        %1103 = vmatpush1.msra.mxu0 0.0
        %1104 = vmatprep.subr.mxu0 0.0
        %1105 = vmatpush1.msra.mxu0 0.0
        %1106 = vmatprep.subr.mxu0 0.0
        %1107 = vmatpush1.msra.mxu0 0.0
        %1108 = vmatprep.subr.mxu0 0.0
        %1109 = vmatpush1.msra.mxu0 0.0
        %1110 = vmatprep.subr.mxu0 0.0
        %1111 = vmatpush1.msra.mxu0 0.0
        %1112 = vmatprep.subr.mxu0 0.0
        %1113 = vmatpush1.msra.mxu0 0.0
        %1114 = vmatprep.subr.mxu0 0.0
        %1115 = vmatpush1.msra.mxu0 0.0
        %1116 = vmatprep.subr.mxu0 0.0
        %1117 = vmatpush1.msra.mxu0 0.0
        %1118 = vmatprep.subr.mxu0 0.0
        %1119 = vmatpush1.msra.mxu0 0.0
        %1120 = vmatprep.subr.mxu0 0.0
        %1121 = vmatpush1.msra.mxu0 0.0
        %1122 = vmatprep.subr.mxu0 0.0
        %1123 = vmatpush1.msra.mxu0 %v1087
        %1124 = vmatprep.subr.mxu0 0.0
        %1125 = vmatpush2.msra.mxu0 0.0
        %1126 = vmatprep.subr.mxu0 0.0
        %1127 = vmatpush2.msra.mxu0 0.0
        %1128 = vmatprep.subr.mxu0 0.0
        %1129 = vmatpush2.msra.mxu0 0.0
        %1130 = vmatprep.subr.mxu0 0.0
        %1131 = vmatpush2.msra.mxu0 0.0
        %1132 = vmatprep.subr.mxu0 0.0
        %1133 = vmatpush2.msra.mxu0 0.0
        %1134 = vmatprep.subr.mxu0 0.0
        %1135 = vmatpush2.msra.mxu0 0.0
        %1136 = vmatprep.subr.mxu0 0.0
        %1137 = vmatpush2.msra.mxu0 0.0
        %1138 = vmatprep.subr.mxu0 0.0
        %1139 = vmatpush2.msra.mxu0 0.0
        %1140 = vmatprep.subr.mxu0 0.0
        %1141 = vmatpush2.msra.mxu0 0.0
        %1142 = vmatprep.subr.mxu0 0.0
        %1143 = vmatpush2.msra.mxu0 0.0
        %1144 = vmatprep.subr.mxu0 0.0
        %1145 = vmatpush2.msra.mxu0 0.0
        %1146 = vmatprep.subr.mxu0 0.0
        %1147 = vmatpush2.msra.mxu0 0.0
        %1148 = vmatprep.subr.mxu0 0.0
        %1149 = vmatpush2.msra.mxu0 0.0
        %1150 = vmatprep.subr.mxu0 0.0
        %1151 = vmatpush2.msra.mxu0 0.0
        %1152 = vmatprep.subr.mxu0 0.0
        %1153 = vmatpush2.msra.mxu0 0.0
        %1154 = vmatprep.subr.mxu0 0.0
        %1155 = vmatpush2.msra.mxu0 0.0
        %1156 = vmatprep.mubr.f32.mxu0 0.0
        %1157 = vmatmul.mubr.f32.gmra.mxu0 %v1090
        %v1158 = vpop.f32.mrf.mxu0
        %v1159 = vadd.f32 0.0, %v1158
        %v1160 = vpop.f32.mrf.mxu0
        %1161 = vdwg.mxu0
        %1163 = vrot.lane.b32.xlu0 %v1159, 16
        %v1164 = vpop.permute.xlu0 %1163
        %vm1166 = vcmask 162944
        %1167 = vst.msk [vmem:[#allocation3] sm:$0xff] %vm1166, %v1164
        %v1168 = vld [vmem:[#allocation2] sm:$0xff]
        %1170 = vrot.lane.b32.xlu0 %v1168, 108
        %v1171 = vpop.permute.xlu0 %1170
        %1172 = vrot.lane.b32.xlu0 %v1168, 76
        %v1173 = vpop.permute.xlu0 %1172
        %v1174 = vsel %vm312, %v1171, 0
        %v1176 = vsel %vm312, %v1173, 0
        %1178 = vmatprep.subr.mxu0 0.0
        %1179 = vmatpush1.xpose.msra.mxu0 0.0
        %1180 = vmatprep.subr.mxu0 0.0
        %1181 = vmatpush1.xpose.msra.mxu0 0.0
        %1182 = vmatprep.subr.mxu0 0.0
        %1183 = vmatpush1.xpose.msra.mxu0 0.0
        %1184 = vmatprep.subr.mxu0 0.0
        %1185 = vmatpush1.xpose.msra.mxu0 0.0
        %1186 = vmatprep.subr.mxu0 0.0
        %1187 = vmatpush1.xpose.msra.mxu0 0.0
        %1188 = vmatprep.subr.mxu0 0.0
        %1189 = vmatpush1.xpose.msra.mxu0 0.0
        %1190 = vmatprep.subr.mxu0 0.0
        %1191 = vmatpush1.xpose.msra.mxu0 0.0
        %1192 = vmatprep.subr.mxu0 0.0
        %1193 = vmatpush1.xpose.msra.mxu0 0.0
        %1194 = vmatprep.subr.mxu0 0.0
        %1195 = vmatpush1.xpose.msra.mxu0 0.0
        %1196 = vmatprep.subr.mxu0 0.0
        %1197 = vmatpush1.xpose.msra.mxu0 0.0
        %1198 = vmatprep.subr.mxu0 0.0
        %1199 = vmatpush1.xpose.msra.mxu0 0.0
        %1200 = vmatprep.subr.mxu0 0.0
        %1201 = vmatpush1.xpose.msra.mxu0 0.0
        %1202 = vmatprep.subr.mxu0 0.0
        %1203 = vmatpush1.xpose.msra.mxu0 0.0
        %1204 = vmatprep.subr.mxu0 0.0
        %1205 = vmatpush1.xpose.msra.mxu0 0.0
        %1206 = vmatprep.subr.mxu0 0.0
        %1207 = vmatpush1.xpose.msra.mxu0 0.0
        %1208 = vmatprep.subr.mxu0 0.0
        %1209 = vmatpush1.xpose.msra.mxu0 %v1176
        %1210 = vmatprep.subr.mxu0 0.0
        %1211 = vmatpush2.xpose.msra.mxu0 0.0
        %1212 = vmatprep.subr.mxu0 0.0
        %1213 = vmatpush2.xpose.msra.mxu0 0.0
        %1214 = vmatprep.subr.mxu0 0.0
        %1215 = vmatpush2.xpose.msra.mxu0 0.0
        %1216 = vmatprep.subr.mxu0 0.0
        %1217 = vmatpush2.xpose.msra.mxu0 0.0
        %1218 = vmatprep.subr.mxu0 0.0
        %1219 = vmatpush2.xpose.msra.mxu0 0.0
        %1220 = vmatprep.subr.mxu0 0.0
        %1221 = vmatpush2.xpose.msra.mxu0 0.0
        %1222 = vmatprep.subr.mxu0 0.0
        %1223 = vmatpush2.xpose.msra.mxu0 0.0
        %1224 = vmatprep.subr.mxu0 0.0
        %1225 = vmatpush2.xpose.msra.mxu0 0.0
        %1226 = vmatprep.subr.mxu0 0.0
        %1227 = vmatpush2.xpose.msra.mxu0 0.0
        %1228 = vmatprep.subr.mxu0 0.0
        %1229 = vmatpush2.xpose.msra.mxu0 0.0
        %1230 = vmatprep.subr.mxu0 0.0
        %1231 = vmatpush2.xpose.msra.mxu0 0.0
        %1232 = vmatprep.subr.mxu0 0.0
        %1233 = vmatpush2.xpose.msra.mxu0 0.0
        %1234 = vmatprep.subr.mxu0 0.0
        %1235 = vmatpush2.xpose.msra.mxu0 0.0
        %1236 = vmatprep.subr.mxu0 0.0
        %1237 = vmatpush2.xpose.msra.mxu0 0.0
        %1238 = vmatprep.subr.mxu0 0.0
        %1239 = vmatpush2.xpose.msra.mxu0 0.0
        %1240 = vmatprep.subr.mxu0 0.0
        %1241 = vmatpush2.xpose.msra.mxu0 0.0
        %1242 = vmatprep.mubr.f32.mxu0 0.0
        %1243 = vmatmul.mubr.f32.gmra.mxu0 %v1174
        %v1244 = vpop.f32.mrf.mxu0
        %v1245 = vadd.f32 0.0, %v1244
        %v1246 = vpop.f32.mrf.mxu0
        %1247 = vdwg.mxu0
        %v1248 = vsel %vm387, %v1245, -inf
        %1249 = vmax.xlane.f32.xlu0 %v1248
        %v1250 = vpop.xlane.xlu0 %1249
        %v1251 = vsub.f32 %v1245, %v1250
        %v1252 = vmul.f32 %v1251, 1.442695
        %v1253 = vpow.pop %v1252
        %v1254 = vsel %vm387, %v1253, 0.0
        %1255 = vadd.xlane.f32.xlu0 %v1254
        %v1256 = vpop.xlane.xlu0 %1255
        %v1257 = vrcp.pop %v1256
        %v1258 = vmul.f32 %v1253, %v1257
        %1259 = vrot.lane.b32.xlu0 %v1168, 44
        %v1260 = vpop.permute.xlu0 %1259
        %v1263 = vsel %vm387, %v1258, 0
        %1265 = vmatprep.subr.mxu0 0.0
        %1266 = vmatpush1.msra.mxu0 0.0
        %1267 = vmatprep.subr.mxu0 0.0
        %1268 = vmatpush1.msra.mxu0 0.0
        %1269 = vmatprep.subr.mxu0 0.0
        %1270 = vmatpush1.msra.mxu0 0.0
        %1271 = vmatprep.subr.mxu0 0.0
        %1272 = vmatpush1.msra.mxu0 0.0
        %1273 = vmatprep.subr.mxu0 0.0
        %1274 = vmatpush1.msra.mxu0 0.0
        %1275 = vmatprep.subr.mxu0 0.0
        %1276 = vmatpush1.msra.mxu0 0.0
        %1277 = vmatprep.subr.mxu0 0.0
        %1278 = vmatpush1.msra.mxu0 0.0
        %1279 = vmatprep.subr.mxu0 0.0
        %1280 = vmatpush1.msra.mxu0 0.0
        %1281 = vmatprep.subr.mxu0 0.0
        %1282 = vmatpush1.msra.mxu0 0.0
        %1283 = vmatprep.subr.mxu0 0.0
        %1284 = vmatpush1.msra.mxu0 0.0
        %1285 = vmatprep.subr.mxu0 0.0
        %1286 = vmatpush1.msra.mxu0 0.0
        %1287 = vmatprep.subr.mxu0 0.0
        %1288 = vmatpush1.msra.mxu0 0.0
        %1289 = vmatprep.subr.mxu0 0.0
        %1290 = vmatpush1.msra.mxu0 0.0
        %1291 = vmatprep.subr.mxu0 0.0
        %1292 = vmatpush1.msra.mxu0 0.0
        %1293 = vmatprep.subr.mxu0 0.0
        %1294 = vmatpush1.msra.mxu0 0.0
        %1295 = vmatprep.subr.mxu0 0.0
        %1296 = vmatpush1.msra.mxu0 %v1260
        %1297 = vmatprep.subr.mxu0 0.0
        %1298 = vmatpush2.msra.mxu0 0.0
        %1299 = vmatprep.subr.mxu0 0.0
        %1300 = vmatpush2.msra.mxu0 0.0
        %1301 = vmatprep.subr.mxu0 0.0
        %1302 = vmatpush2.msra.mxu0 0.0
        %1303 = vmatprep.subr.mxu0 0.0
        %1304 = vmatpush2.msra.mxu0 0.0
        %1305 = vmatprep.subr.mxu0 0.0
        %1306 = vmatpush2.msra.mxu0 0.0
        %1307 = vmatprep.subr.mxu0 0.0
        %1308 = vmatpush2.msra.mxu0 0.0
        %1309 = vmatprep.subr.mxu0 0.0
        %1310 = vmatpush2.msra.mxu0 0.0
        %1311 = vmatprep.subr.mxu0 0.0
        %1312 = vmatpush2.msra.mxu0 0.0
        %1313 = vmatprep.subr.mxu0 0.0
        %1314 = vmatpush2.msra.mxu0 0.0
        %1315 = vmatprep.subr.mxu0 0.0
        %1316 = vmatpush2.msra.mxu0 0.0
        %1317 = vmatprep.subr.mxu0 0.0
        %1318 = vmatpush2.msra.mxu0 0.0
        %1319 = vmatprep.subr.mxu0 0.0
        %1320 = vmatpush2.msra.mxu0 0.0
        %1321 = vmatprep.subr.mxu0 0.0
        %1322 = vmatpush2.msra.mxu0 0.0
        %1323 = vmatprep.subr.mxu0 0.0
        %1324 = vmatpush2.msra.mxu0 0.0
        %1325 = vmatprep.subr.mxu0 0.0
        %1326 = vmatpush2.msra.mxu0 0.0
        %1327 = vmatprep.subr.mxu0 0.0
        %1328 = vmatpush2.msra.mxu0 0.0
        %1329 = vmatprep.mubr.f32.mxu0 0.0
        %1330 = vmatmul.mubr.f32.gmra.mxu0 %v1263
        %v1331 = vpop.f32.mrf.mxu0
        %v1332 = vadd.f32 0.0, %v1331
        %v1333 = vpop.f32.mrf.mxu0
        %1334 = vdwg.mxu0
        %1336 = vrot.lane.b32.xlu0 %v1332, 20
        %v1337 = vpop.permute.xlu0 %1336
        %vm1339 = vcmask 195744
        %1340 = vst.msk [vmem:[#allocation3] sm:$0xff] %vm1339, %v1337
        %v1341 = vld [vmem:[#allocation2] sm:$0xff]
        %1343 = vrot.lane.b32.xlu0 %v1341, 104
        %v1344 = vpop.permute.xlu0 %1343
        %1345 = vrot.lane.b32.xlu0 %v1341, 72
        %v1346 = vpop.permute.xlu0 %1345
        %v1347 = vsel %vm312, %v1344, 0
        %v1349 = vsel %vm312, %v1346, 0
        %1351 = vmatprep.subr.mxu0 0.0
        %1352 = vmatpush1.xpose.msra.mxu0 0.0
        %1353 = vmatprep.subr.mxu0 0.0
        %1354 = vmatpush1.xpose.msra.mxu0 0.0
        %1355 = vmatprep.subr.mxu0 0.0
        %1356 = vmatpush1.xpose.msra.mxu0 0.0
        %1357 = vmatprep.subr.mxu0 0.0
        %1358 = vmatpush1.xpose.msra.mxu0 0.0
        %1359 = vmatprep.subr.mxu0 0.0
        %1360 = vmatpush1.xpose.msra.mxu0 0.0
        %1361 = vmatprep.subr.mxu0 0.0
        %1362 = vmatpush1.xpose.msra.mxu0 0.0
        %1363 = vmatprep.subr.mxu0 0.0
        %1364 = vmatpush1.xpose.msra.mxu0 0.0
        %1365 = vmatprep.subr.mxu0 0.0
        %1366 = vmatpush1.xpose.msra.mxu0 0.0
        %1367 = vmatprep.subr.mxu0 0.0
        %1368 = vmatpush1.xpose.msra.mxu0 0.0
        %1369 = vmatprep.subr.mxu0 0.0
        %1370 = vmatpush1.xpose.msra.mxu0 0.0
        %1371 = vmatprep.subr.mxu0 0.0
        %1372 = vmatpush1.xpose.msra.mxu0 0.0
        %1373 = vmatprep.subr.mxu0 0.0
        %1374 = vmatpush1.xpose.msra.mxu0 0.0
        %1375 = vmatprep.subr.mxu0 0.0
        %1376 = vmatpush1.xpose.msra.mxu0 0.0
        %1377 = vmatprep.subr.mxu0 0.0
        %1378 = vmatpush1.xpose.msra.mxu0 0.0
        %1379 = vmatprep.subr.mxu0 0.0
        %1380 = vmatpush1.xpose.msra.mxu0 0.0
        %1381 = vmatprep.subr.mxu0 0.0
        %1382 = vmatpush1.xpose.msra.mxu0 %v1349
        %1383 = vmatprep.subr.mxu0 0.0
        %1384 = vmatpush2.xpose.msra.mxu0 0.0
        %1385 = vmatprep.subr.mxu0 0.0
        %1386 = vmatpush2.xpose.msra.mxu0 0.0
        %1387 = vmatprep.subr.mxu0 0.0
        %1388 = vmatpush2.xpose.msra.mxu0 0.0
        %1389 = vmatprep.subr.mxu0 0.0
        %1390 = vmatpush2.xpose.msra.mxu0 0.0
        %1391 = vmatprep.subr.mxu0 0.0
        %1392 = vmatpush2.xpose.msra.mxu0 0.0
        %1393 = vmatprep.subr.mxu0 0.0
        %1394 = vmatpush2.xpose.msra.mxu0 0.0
        %1395 = vmatprep.subr.mxu0 0.0
        %1396 = vmatpush2.xpose.msra.mxu0 0.0
        %1397 = vmatprep.subr.mxu0 0.0
        %1398 = vmatpush2.xpose.msra.mxu0 0.0
        %1399 = vmatprep.subr.mxu0 0.0
        %1400 = vmatpush2.xpose.msra.mxu0 0.0
        %1401 = vmatprep.subr.mxu0 0.0
        %1402 = vmatpush2.xpose.msra.mxu0 0.0
        %1403 = vmatprep.subr.mxu0 0.0
        %1404 = vmatpush2.xpose.msra.mxu0 0.0
        %1405 = vmatprep.subr.mxu0 0.0
        %1406 = vmatpush2.xpose.msra.mxu0 0.0
        %1407 = vmatprep.subr.mxu0 0.0
        %1408 = vmatpush2.xpose.msra.mxu0 0.0
        %1409 = vmatprep.subr.mxu0 0.0
        %1410 = vmatpush2.xpose.msra.mxu0 0.0
        %1411 = vmatprep.subr.mxu0 0.0
        %1412 = vmatpush2.xpose.msra.mxu0 0.0
        %1413 = vmatprep.subr.mxu0 0.0
        %1414 = vmatpush2.xpose.msra.mxu0 0.0
        %1415 = vmatprep.mubr.f32.mxu0 0.0
        %1416 = vmatmul.mubr.f32.gmra.mxu0 %v1347
        %v1417 = vpop.f32.mrf.mxu0
        %v1418 = vadd.f32 0.0, %v1417
        %v1419 = vpop.f32.mrf.mxu0
        %1420 = vdwg.mxu0
        %v1421 = vsel %vm387, %v1418, -inf
        %1422 = vmax.xlane.f32.xlu0 %v1421
        %v1423 = vpop.xlane.xlu0 %1422
        %v1424 = vsub.f32 %v1418, %v1423
        %v1425 = vmul.f32 %v1424, 1.442695
        %v1426 = vpow.pop %v1425
        %v1427 = vsel %vm387, %v1426, 0.0
        %1428 = vadd.xlane.f32.xlu0 %v1427
        %v1429 = vpop.xlane.xlu0 %1428
        %v1430 = vrcp.pop %v1429
        %v1431 = vmul.f32 %v1426, %v1430
        %1432 = vrot.lane.b32.xlu0 %v1341, 40
        %v1433 = vpop.permute.xlu0 %1432
        %v1436 = vsel %vm387, %v1431, 0
        %1438 = vmatprep.subr.mxu0 0.0
        %1439 = vmatpush1.msra.mxu0 0.0
        %1440 = vmatprep.subr.mxu0 0.0
        %1441 = vmatpush1.msra.mxu0 0.0
        %1442 = vmatprep.subr.mxu0 0.0
        %1443 = vmatpush1.msra.mxu0 0.0
        %1444 = vmatprep.subr.mxu0 0.0
        %1445 = vmatpush1.msra.mxu0 0.0
        %1446 = vmatprep.subr.mxu0 0.0
        %1447 = vmatpush1.msra.mxu0 0.0
        %1448 = vmatprep.subr.mxu0 0.0
        %1449 = vmatpush1.msra.mxu0 0.0
        %1450 = vmatprep.subr.mxu0 0.0
        %1451 = vmatpush1.msra.mxu0 0.0
        %1452 = vmatprep.subr.mxu0 0.0
        %1453 = vmatpush1.msra.mxu0 0.0
        %1454 = vmatprep.subr.mxu0 0.0
        %1455 = vmatpush1.msra.mxu0 0.0
        %1456 = vmatprep.subr.mxu0 0.0
        %1457 = vmatpush1.msra.mxu0 0.0
        %1458 = vmatprep.subr.mxu0 0.0
        %1459 = vmatpush1.msra.mxu0 0.0
        %1460 = vmatprep.subr.mxu0 0.0
        %1461 = vmatpush1.msra.mxu0 0.0
        %1462 = vmatprep.subr.mxu0 0.0
        %1463 = vmatpush1.msra.mxu0 0.0
        %1464 = vmatprep.subr.mxu0 0.0
        %1465 = vmatpush1.msra.mxu0 0.0
        %1466 = vmatprep.subr.mxu0 0.0
        %1467 = vmatpush1.msra.mxu0 0.0
        %1468 = vmatprep.subr.mxu0 0.0
        %1469 = vmatpush1.msra.mxu0 %v1433
        %1470 = vmatprep.subr.mxu0 0.0
        %1471 = vmatpush2.msra.mxu0 0.0
        %1472 = vmatprep.subr.mxu0 0.0
        %1473 = vmatpush2.msra.mxu0 0.0
        %1474 = vmatprep.subr.mxu0 0.0
        %1475 = vmatpush2.msra.mxu0 0.0
        %1476 = vmatprep.subr.mxu0 0.0
        %1477 = vmatpush2.msra.mxu0 0.0
        %1478 = vmatprep.subr.mxu0 0.0
        %1479 = vmatpush2.msra.mxu0 0.0
        %1480 = vmatprep.subr.mxu0 0.0
        %1481 = vmatpush2.msra.mxu0 0.0
        %1482 = vmatprep.subr.mxu0 0.0
        %1483 = vmatpush2.msra.mxu0 0.0
        %1484 = vmatprep.subr.mxu0 0.0
        %1485 = vmatpush2.msra.mxu0 0.0
        %1486 = vmatprep.subr.mxu0 0.0
        %1487 = vmatpush2.msra.mxu0 0.0
        %1488 = vmatprep.subr.mxu0 0.0
        %1489 = vmatpush2.msra.mxu0 0.0
        %1490 = vmatprep.subr.mxu0 0.0
        %1491 = vmatpush2.msra.mxu0 0.0
        %1492 = vmatprep.subr.mxu0 0.0
        %1493 = vmatpush2.msra.mxu0 0.0
        %1494 = vmatprep.subr.mxu0 0.0
        %1495 = vmatpush2.msra.mxu0 0.0
        %1496 = vmatprep.subr.mxu0 0.0
        %1497 = vmatpush2.msra.mxu0 0.0
        %1498 = vmatprep.subr.mxu0 0.0
        %1499 = vmatpush2.msra.mxu0 0.0
        %1500 = vmatprep.subr.mxu0 0.0
        %1501 = vmatpush2.msra.mxu0 0.0
        %1502 = vmatprep.mubr.f32.mxu0 0.0
        %1503 = vmatmul.mubr.f32.gmra.mxu0 %v1436
        %v1504 = vpop.f32.mrf.mxu0
        %v1505 = vadd.f32 0.0, %v1504
        %v1506 = vpop.f32.mrf.mxu0
        %1507 = vdwg.mxu0
        %1509 = vrot.lane.b32.xlu0 %v1505, 24
        %v1510 = vpop.permute.xlu0 %1509
        %vm1512 = vcmask 228544
        %1513 = vst.msk [vmem:[#allocation3] sm:$0xff] %vm1512, %v1510
        %v1514 = vld [vmem:[#allocation2] sm:$0xff]
        %1516 = vrot.lane.b32.xlu0 %v1514, 100
        %v1517 = vpop.permute.xlu0 %1516
        %1518 = vrot.lane.b32.xlu0 %v1514, 68
        %v1519 = vpop.permute.xlu0 %1518
        %v1520 = vsel %vm312, %v1517, 0
        %v1522 = vsel %vm312, %v1519, 0
        %1524 = vmatprep.subr.mxu0 0.0
        %1525 = vmatpush1.xpose.msra.mxu0 0.0
        %1526 = vmatprep.subr.mxu0 0.0
        %1527 = vmatpush1.xpose.msra.mxu0 0.0
        %1528 = vmatprep.subr.mxu0 0.0
        %1529 = vmatpush1.xpose.msra.mxu0 0.0
        %1530 = vmatprep.subr.mxu0 0.0
        %1531 = vmatpush1.xpose.msra.mxu0 0.0
        %1532 = vmatprep.subr.mxu0 0.0
        %1533 = vmatpush1.xpose.msra.mxu0 0.0
        %1534 = vmatprep.subr.mxu0 0.0
        %1535 = vmatpush1.xpose.msra.mxu0 0.0
        %1536 = vmatprep.subr.mxu0 0.0
        %1537 = vmatpush1.xpose.msra.mxu0 0.0
        %1538 = vmatprep.subr.mxu0 0.0
        %1539 = vmatpush1.xpose.msra.mxu0 0.0
        %1540 = vmatprep.subr.mxu0 0.0
        %1541 = vmatpush1.xpose.msra.mxu0 0.0
        %1542 = vmatprep.subr.mxu0 0.0
        %1543 = vmatpush1.xpose.msra.mxu0 0.0
        %1544 = vmatprep.subr.mxu0 0.0
        %1545 = vmatpush1.xpose.msra.mxu0 0.0
        %1546 = vmatprep.subr.mxu0 0.0
        %1547 = vmatpush1.xpose.msra.mxu0 0.0
        %1548 = vmatprep.subr.mxu0 0.0
        %1549 = vmatpush1.xpose.msra.mxu0 0.0
        %1550 = vmatprep.subr.mxu0 0.0
        %1551 = vmatpush1.xpose.msra.mxu0 0.0
        %1552 = vmatprep.subr.mxu0 0.0
        %1553 = vmatpush1.xpose.msra.mxu0 0.0
        %1554 = vmatprep.subr.mxu0 0.0
        %1555 = vmatpush1.xpose.msra.mxu0 %v1522
        %1556 = vmatprep.subr.mxu0 0.0
        %1557 = vmatpush2.xpose.msra.mxu0 0.0
        %1558 = vmatprep.subr.mxu0 0.0
        %1559 = vmatpush2.xpose.msra.mxu0 0.0
        %1560 = vmatprep.subr.mxu0 0.0
        %1561 = vmatpush2.xpose.msra.mxu0 0.0
        %1562 = vmatprep.subr.mxu0 0.0
        %1563 = vmatpush2.xpose.msra.mxu0 0.0
        %1564 = vmatprep.subr.mxu0 0.0
        %1565 = vmatpush2.xpose.msra.mxu0 0.0
        %1566 = vmatprep.subr.mxu0 0.0
        %1567 = vmatpush2.xpose.msra.mxu0 0.0
        %1568 = vmatprep.subr.mxu0 0.0
        %1569 = vmatpush2.xpose.msra.mxu0 0.0
        %1570 = vmatprep.subr.mxu0 0.0
        %1571 = vmatpush2.xpose.msra.mxu0 0.0
        %1572 = vmatprep.subr.mxu0 0.0
        %1573 = vmatpush2.xpose.msra.mxu0 0.0
        %1574 = vmatprep.subr.mxu0 0.0
        %1575 = vmatpush2.xpose.msra.mxu0 0.0
        %1576 = vmatprep.subr.mxu0 0.0
        %1577 = vmatpush2.xpose.msra.mxu0 0.0
        %1578 = vmatprep.subr.mxu0 0.0
        %1579 = vmatpush2.xpose.msra.mxu0 0.0
        %1580 = vmatprep.subr.mxu0 0.0
        %1581 = vmatpush2.xpose.msra.mxu0 0.0
        %1582 = vmatprep.subr.mxu0 0.0
        %1583 = vmatpush2.xpose.msra.mxu0 0.0
        %1584 = vmatprep.subr.mxu0 0.0
        %1585 = vmatpush2.xpose.msra.mxu0 0.0
        %1586 = vmatprep.subr.mxu0 0.0
        %1587 = vmatpush2.xpose.msra.mxu0 0.0
        %1588 = vmatprep.mubr.f32.mxu0 0.0
        %1589 = vmatmul.mubr.f32.gmra.mxu0 %v1520
        %v1590 = vpop.f32.mrf.mxu0
        %v1591 = vadd.f32 0.0, %v1590
        %v1592 = vpop.f32.mrf.mxu0
        %1593 = vdwg.mxu0
        %v1594 = vsel %vm387, %v1591, -inf
        %1595 = vmax.xlane.f32.xlu0 %v1594
        %v1596 = vpop.xlane.xlu0 %1595
        %v1597 = vsub.f32 %v1591, %v1596
        %v1598 = vmul.f32 %v1597, 1.442695
        %v1599 = vpow.pop %v1598
        %v1600 = vsel %vm387, %v1599, 0.0
        %1601 = vadd.xlane.f32.xlu0 %v1600
        %v1602 = vpop.xlane.xlu0 %1601
        %v1603 = vrcp.pop %v1602
        %v1604 = vmul.f32 %v1599, %v1603
        %1605 = vrot.lane.b32.xlu0 %v1514, 36
        %v1606 = vpop.permute.xlu0 %1605
        %v1609 = vsel %vm387, %v1604, 0
        %1611 = vmatprep.subr.mxu0 0.0
        %1612 = vmatpush1.msra.mxu0 0.0
        %1613 = vmatprep.subr.mxu0 0.0
        %1614 = vmatpush1.msra.mxu0 0.0
        %1615 = vmatprep.subr.mxu0 0.0
        %1616 = vmatpush1.msra.mxu0 0.0
        %1617 = vmatprep.subr.mxu0 0.0
        %1618 = vmatpush1.msra.mxu0 0.0
        %1619 = vmatprep.subr.mxu0 0.0
        %1620 = vmatpush1.msra.mxu0 0.0
        %1621 = vmatprep.subr.mxu0 0.0
        %1622 = vmatpush1.msra.mxu0 0.0
        %1623 = vmatprep.subr.mxu0 0.0
        %1624 = vmatpush1.msra.mxu0 0.0
        %1625 = vmatprep.subr.mxu0 0.0
        %1626 = vmatpush1.msra.mxu0 0.0
        %1627 = vmatprep.subr.mxu0 0.0
        %1628 = vmatpush1.msra.mxu0 0.0
        %1629 = vmatprep.subr.mxu0 0.0
        %1630 = vmatpush1.msra.mxu0 0.0
        %1631 = vmatprep.subr.mxu0 0.0
        %1632 = vmatpush1.msra.mxu0 0.0
        %1633 = vmatprep.subr.mxu0 0.0
        %1634 = vmatpush1.msra.mxu0 0.0
        %1635 = vmatprep.subr.mxu0 0.0
        %1636 = vmatpush1.msra.mxu0 0.0
        %1637 = vmatprep.subr.mxu0 0.0
        %1638 = vmatpush1.msra.mxu0 0.0
        %1639 = vmatprep.subr.mxu0 0.0
        %1640 = vmatpush1.msra.mxu0 0.0
        %1641 = vmatprep.subr.mxu0 0.0
        %1642 = vmatpush1.msra.mxu0 %v1606
        %1643 = vmatprep.subr.mxu0 0.0
        %1644 = vmatpush2.msra.mxu0 0.0
        %1645 = vmatprep.subr.mxu0 0.0
        %1646 = vmatpush2.msra.mxu0 0.0
        %1647 = vmatprep.subr.mxu0 0.0
        %1648 = vmatpush2.msra.mxu0 0.0
        %1649 = vmatprep.subr.mxu0 0.0
        %1650 = vmatpush2.msra.mxu0 0.0
        %1651 = vmatprep.subr.mxu0 0.0
        %1652 = vmatpush2.msra.mxu0 0.0
        %1653 = vmatprep.subr.mxu0 0.0
        %1654 = vmatpush2.msra.mxu0 0.0
        %1655 = vmatprep.subr.mxu0 0.0
        %1656 = vmatpush2.msra.mxu0 0.0
        %1657 = vmatprep.subr.mxu0 0.0
        %1658 = vmatpush2.msra.mxu0 0.0
        %1659 = vmatprep.subr.mxu0 0.0
        %1660 = vmatpush2.msra.mxu0 0.0
        %1661 = vmatprep.subr.mxu0 0.0
        %1662 = vmatpush2.msra.mxu0 0.0
        %1663 = vmatprep.subr.mxu0 0.0
        %1664 = vmatpush2.msra.mxu0 0.0
        %1665 = vmatprep.subr.mxu0 0.0
        %1666 = vmatpush2.msra.mxu0 0.0
        %1667 = vmatprep.subr.mxu0 0.0
        %1668 = vmatpush2.msra.mxu0 0.0
        %1669 = vmatprep.subr.mxu0 0.0
        %1670 = vmatpush2.msra.mxu0 0.0
        %1671 = vmatprep.subr.mxu0 0.0
        %1672 = vmatpush2.msra.mxu0 0.0
        %1673 = vmatprep.subr.mxu0 0.0
        %1674 = vmatpush2.msra.mxu0 0.0
        %1675 = vmatprep.mubr.f32.mxu0 0.0
        %1676 = vmatmul.mubr.f32.gmra.mxu0 %v1609
        %v1677 = vpop.f32.mrf.mxu0
        %v1678 = vadd.f32 0.0, %v1677
        %v1679 = vpop.f32.mrf.mxu0
        %1680 = vdwg.mxu0
        %1682 = vrot.lane.b32.xlu0 %v1678, 28
        %v1683 = vpop.permute.xlu0 %1682
        %vm1685 = vcmask 261344
        %1686 = vst.msk [vmem:[#allocation3] sm:$0xff] %vm1685, %v1683
        %v1687 = vld [vmem:[#allocation3] sm:$0xff]
        %v1688 = vld [vmem:[%s3] sm:$0xff]
        %v1689 = vld [vmem:[%s3 + $0x8] sm:$0xff]
        %v1690 = vld [vmem:[%s3 + $0x10] sm:$0xff]
        %v1691 = vld [vmem:[%s3 + $0x18] sm:$0xff]
        %v1692 = vld [vmem:[%s4] sm:$0x1]
        %v1694 = vlaneseq
        %v1695 = vshrl.u32 %v1694, 7
        %v1696 = vsub.s32 0, %v1695
        %v1697 = vrot.slane %v1692, %v1696
        %v1700 = vsel %vm232, %v1687, 0
        %1702 = vmatprep.subr.mxu0 0.0
        %1703 = vmatpush1.msra.mxu0 0.0
        %1704 = vmatprep.subr.mxu0 0.0
        %1705 = vmatpush1.msra.mxu0 0.0
        %1706 = vmatprep.subr.mxu0 0.0
        %1707 = vmatpush1.msra.mxu0 0.0
        %1708 = vmatprep.subr.mxu0 0.0
        %1709 = vmatpush1.msra.mxu0 0.0
        %1710 = vmatprep.subr.mxu0 0.0
        %1711 = vmatpush1.msra.mxu0 0.0
        %1712 = vmatprep.subr.mxu0 0.0
        %1713 = vmatpush1.msra.mxu0 0.0
        %1714 = vmatprep.subr.mxu0 0.0
        %1715 = vmatpush1.msra.mxu0 0.0
        %1716 = vmatprep.subr.mxu0 0.0
        %1717 = vmatpush1.msra.mxu0 0.0
        %1718 = vmatprep.subr.mxu0 0.0
        %1719 = vmatpush1.msra.mxu0 0.0
        %1720 = vmatprep.subr.mxu0 0.0
        %1721 = vmatpush1.msra.mxu0 0.0
        %1722 = vmatprep.subr.mxu0 0.0
        %1723 = vmatpush1.msra.mxu0 0.0
        %1724 = vmatprep.subr.mxu0 0.0
        %1725 = vmatpush1.msra.mxu0 0.0
        %1726 = vmatprep.subr.mxu0 0.0
        %1727 = vmatpush1.msra.mxu0 %v1691
        %1728 = vmatprep.subr.mxu0 0.0
        %1729 = vmatpush1.msra.mxu0 %v1690
        %1730 = vmatprep.subr.mxu0 0.0
        %1731 = vmatpush1.msra.mxu0 %v1689
        %1732 = vmatprep.subr.mxu0 0.0
        %1733 = vmatpush1.msra.mxu0 %v1688
        %1734 = vmatprep.subr.mxu0 0.0
        %1735 = vmatpush2.msra.mxu0 0.0
        %1736 = vmatprep.subr.mxu0 0.0
        %1737 = vmatpush2.msra.mxu0 0.0
        %1738 = vmatprep.subr.mxu0 0.0
        %1739 = vmatpush2.msra.mxu0 0.0
        %1740 = vmatprep.subr.mxu0 0.0
        %1741 = vmatpush2.msra.mxu0 0.0
        %1742 = vmatprep.subr.mxu0 0.0
        %1743 = vmatpush2.msra.mxu0 0.0
        %1744 = vmatprep.subr.mxu0 0.0
        %1745 = vmatpush2.msra.mxu0 0.0
        %1746 = vmatprep.subr.mxu0 0.0
        %1747 = vmatpush2.msra.mxu0 0.0
        %1748 = vmatprep.subr.mxu0 0.0
        %1749 = vmatpush2.msra.mxu0 0.0
        %1750 = vmatprep.subr.mxu0 0.0
        %1751 = vmatpush2.msra.mxu0 0.0
        %1752 = vmatprep.subr.mxu0 0.0
        %1753 = vmatpush2.msra.mxu0 0.0
        %1754 = vmatprep.subr.mxu0 0.0
        %1755 = vmatpush2.msra.mxu0 0.0
        %1756 = vmatprep.subr.mxu0 0.0
        %1757 = vmatpush2.msra.mxu0 0.0
        %1758 = vmatprep.subr.mxu0 0.0
        %1759 = vmatpush2.msra.mxu0 0.0
        %1760 = vmatprep.subr.mxu0 0.0
        %1761 = vmatpush2.msra.mxu0 0.0
        %1762 = vmatprep.subr.mxu0 0.0
        %1763 = vmatpush2.msra.mxu0 0.0
        %1764 = vmatprep.subr.mxu0 0.0
        %1765 = vmatpush2.msra.mxu0 0.0
        %1766 = vmatprep.mubr.f32.mxu0 0.0
        %1767 = vmatmul.mubr.f32.gmra.mxu0 %v1700
        %v1768 = vpop.f32.mrf.mxu0
        %v1769 = vadd.f32 %v1697, %v1768
        %v1770 = vpop.f32.mrf.mxu0
        %1771 = vdwg.mxu0
        %1772 = vst.msk [vmem:[%s215] sm:$0xff] %vm232, %v1769
        %s1773 = sand.u32 %s137, 1
        %s1774 = scalar_lea.sflag [#allocation5], %s1773
        %s1775 = sand.u32 %s137, 1
        %s1776 = smul.addr %s1775, 8
        %s1777 = scalar_lea.vmem [#allocation4], %s1776
        // Predicated region
        $region41: #{attention_forward.1} parent=39 // pred_check
          %p1778 = pneg %p147
        $region42: #{attention_forward.1} parent=39 // pred_check_branch
          %1780 = sbr.rel (%p1778) target = $region44
        $region43: #{attention_forward.1} parent=39 // pred_region
          %s1782 = ssub.s32 128, 128
          %1783 = vsyncadd %s1774, %s1782
          %s1784 = smul.addr %s19, 128
          %s1785 = scalar_lea.hbm %s5, %s1784
          %s1787 = sshll.u32 %s1777, 4
          %s1788 = int_to_ptr.vmem [resolvable:$true] %s1787
          %1790 = dma.vmem_to_hbm [thread:$0]  %s1788, 128, %s1785, %s1774
        $region44: #{attention_forward.1} parent=39 // pred_fallthru
          _
      $region40: #{attention_forward.1} parent=5 // pred_fallthru
        _
      %p1791 = scmp.le.s32.totalorder 2, %s14
      // Predicated region
      $region45: #{attention_forward.1} parent=5 // pred_check
        %p1792 = pneg %p1791
      $region46: #{attention_forward.1} parent=5 // pred_check_branch
        %1794 = sbr.rel (%p1792) target = $region48
      $region47: #{attention_forward.1} parent=5 // pred_region
        %s1795 = ssub.s32 %s14, 2
        // Predicated region
        $region49: #{attention_forward.1} parent=47 // pred_check
          %p1796 = pneg %p153
        $region50: #{attention_forward.1} parent=47 // pred_check_branch
          %1798 = sbr.rel (%p1796) target = $region52
        $region51: #{attention_forward.1} parent=47 // pred_region
          %s1799 = sand.u32 %s138, 1
          %s1800 = scalar_lea.sflag [#allocation5], %s1799
          %s1801 = sand.u32 %s138, 1
          %s1802 = smul.addr %s1801, 8
          %s1803 = scalar_lea.vmem [#allocation4], %s1802
          %1804 = dma.done %s1800, 128
        $region52: #{attention_forward.1} parent=47 // pred_fallthru
          _
      $region48: #{attention_forward.1} parent=5 // pred_fallthru
        _
    $region6: #{attention_forward.1} parent=1 // loop_footer
      %s18 = sadd.s32 1, %s14
    $region7: #{attention_forward.1} parent=1 // loop_footer_branch
      %13 = sbr.rel target = $region3
    $region8: #{attention_forward.1} parent=1 // loop_exit
      _
    %1805 = vsyncpa [#allocation5], 1
    %s1806 = scalar_lea.sflag [#allocation5], 1
    %1807 = vsyncpa %s1806, 1

</llo_original>
